<compile_context>
chip_gen: v7x
topology: tpu7x:2x2x1
jax: 0.10.0
libtpu: 0.0.40
codegen_flags: <defaults>
</compile_context>

<pallas_src>
from functools import partial

import jax
import jax.numpy as jnp
from jax import lax
from jax.experimental import pallas as pl
from jax.experimental.pallas import tpu as pltpu


def _make_lstm_har_kernel(num_layers, seq_len, batch_p, hidden_size):
    H, Bp, T = hidden_size, batch_p, seq_len
    G = 4 * H

    def kernel(*refs):
        # refs: x (T*Bp, I) bf16,
        #       [w_ih_l, w_hh_l (bf16), b_l (1,4H) f32] * num_layers,
        #       w_fc (4H, Cp) f32, b_fc (1, Cp) f32,
        #       out (Bp, Cp) f32, pre (T*Bp, 4H) f32 scratch.
        x_ref = refs[0]
        w_refs = refs[1:1 + 3 * num_layers]
        wfc_ref = refs[1 + 3 * num_layers]
        bfc_ref = refs[2 + 3 * num_layers]
        out_ref = refs[3 + 3 * num_layers]
        pre_ref = refs[4 + 3 * num_layers]

        # Lane-constant vectors: act = tanh(gates*q_half)*q_half + q_add is sigmoid on the
        # i/f/o quadrants and tanh on the g quadrant (one full-width EUP push per step).
        lane = lax.broadcasted_iota(jnp.int32, (Bp, G), 1)
        is_g = (lane >= 2 * H) & (lane < 3 * H)
        q_half = jnp.where(is_g, jnp.float32(1.0), jnp.float32(0.5))
        q_add = jnp.where(is_g, jnp.float32(0.0), jnp.float32(0.5))

        # Hoisted layer-0 input projection for the whole sequence (bias folded in).
        pre_ref[...] = (jnp.dot(x_ref[...], w_refs[0][...],
                                preferred_element_type=jnp.float32)
                        + w_refs[2][...])

        # Hoisted (small) weight / bias loads.
        w_hh = [w_refs[3 * l + 1][...] for l in range(num_layers)]
        w_ih = [None] + [w_refs[3 * l][...] for l in range(1, num_layers)]
        bias = [None] + [jnp.broadcast_to(w_refs[3 * l + 2][...], (Bp, G))
                         for l in range(1, num_layers)]

        def cell(act, c_prev):
            # act quadrants: [i | f | g | o]; live state sits in quadrant 1 (lanes H:2H).
            act64 = pltpu.roll(act, 2 * H, 1)            # quadrant1 = o (sign-agnostic)
            ig = pltpu.roll(act * act64, H, 1)           # quadrant1 = i*g (sign-agnostic)
            c_new = ig if c_prev is None else act * c_prev + ig   # q1: f*c + i*g
            h_new = act64 * jnp.tanh(c_new)              # q1: o * tanh(c_new)
            return h_new, h_new.astype(jnp.bfloat16), c_new

        # Wavefront recurrence: t-outer / layer-inner, fully unrolled (T, L static).
        state = [None] * num_layers                      # per layer: (h_f32, h_bf16, c_f32)
        for t in range(T):
            pre_t = pre_ref[t * Bp:(t + 1) * Bp, :]
            for l in range(num_layers):
                if l == 0:
                    g_in = pre_t
                else:
                    g_in = (jnp.dot(state[l - 1][1], w_ih[l],
                                    preferred_element_type=jnp.float32) + bias[l])
                if state[l] is None:                     # t==0 peel: h=c=0, skip w_hh matmul
                    gates, c_prev = g_in, None
                else:
                    gates = g_in + jnp.dot(state[l][1], w_hh[l],
                                           preferred_element_type=jnp.float32)
                    c_prev = state[l][2]
                act = jnp.tanh(gates * q_half) * q_half + q_add
                state[l] = cell(act, c_prev)

        # fc on the top layer's last hidden state; w_fc is zero-padded so only the live
        # quadrant contributes.  Kept f32 for accuracy headroom (single matmul, off chain).
        out_ref[...] = (jnp.dot(state[-1][0], wfc_ref[...],
                                preferred_element_type=jnp.float32)
                        + bfc_ref[...])

    return kernel


def prepare_params(params):
    """One-time weight transform: transpose, bf16 cast, zero-pad with the live rows at H:2H."""
    lstm = params["lstm"]
    H = lstm[0][1].shape[1]
    G = 4 * H
    w_fc, b_fc = params["fc"]
    C = w_fc.shape[0]
    Cp = max(128, ((C + 127) // 128) * 128)

    prepped = []
    for layer, (w_ih, w_hh, b_ih, b_hh) in enumerate(lstm):
        if layer == 0:
            w_ih_k = jnp.transpose(w_ih).astype(jnp.bfloat16)                 # (I, 4H)
        else:
            w_ih_k = (jnp.zeros((G, G), jnp.float32)
                      .at[H:2 * H, :].set(jnp.transpose(w_ih))
                      .astype(jnp.bfloat16))                                  # (4H, 4H)
        w_hh_k = (jnp.zeros((G, G), jnp.float32)
                  .at[H:2 * H, :].set(jnp.transpose(w_hh))
                  .astype(jnp.bfloat16))                                      # (4H, 4H)
        b_k = (b_ih + b_hh).reshape(1, G).astype(jnp.float32)                 # (1, 4H)
        prepped += [w_ih_k, w_hh_k, b_k]

    w_fc_k = (jnp.zeros((G, Cp), jnp.float32)
              .at[H:2 * H, :C].set(jnp.transpose(w_fc).astype(jnp.float32)))  # (4H, Cp)
    b_fc_k = jnp.zeros((1, Cp), jnp.float32).at[0, :C].set(b_fc.astype(jnp.float32))
    prepped += [w_fc_k, b_fc_k]

    meta = dict(num_layers=len(lstm), hidden=H, num_classes=C, classes_padded=Cp)
    return tuple(prepped), meta


@partial(jax.jit, static_argnums=(2,))
def lstm_har_forward(x, prepped, num_classes):
    """x: (B, T, input_size) float32, batch_first.  prepped: output of prepare_params."""
    B, T, I = x.shape
    num_layers = (len(prepped) - 2) // 3
    H = prepped[1].shape[0] // 4
    Cp = prepped[-1].shape[1]
    Bp = max(8, ((B + 7) // 8) * 8)

    # (B, T, I) -> time-major, batch-padded, flattened (T*Bp, I), bf16 (MXU-native).
    x_tm = jnp.transpose(x, (1, 0, 2))
    x_tm = jnp.pad(x_tm, ((0, 0), (0, Bp - B), (0, 0)))
    x_flat = x_tm.reshape(T * Bp, I).astype(jnp.bfloat16)

    kernel = _make_lstm_har_kernel(num_layers, T, Bp, H)
    out_p = pl.pallas_call(
        kernel,
        out_shape=jax.ShapeDtypeStruct((Bp, Cp), jnp.float32),
        in_specs=[pl.BlockSpec(memory_space=pltpu.MemorySpace.VMEM)] * (1 + len(prepped)),
        out_specs=pl.BlockSpec(memory_space=pltpu.MemorySpace.VMEM),
        scratch_shapes=[pltpu.VMEM((T * Bp, 4 * H), jnp.float32)],   # layer-0 pre-gates
    )(x_flat, *prepped)
    return out_p[:B, :num_classes]


def lstm_har_reference(x, params):
    """Pure-JAX reference mirroring PyTorch nn.LSTM (batch_first) + nn.Linear."""
    B, T, _ = x.shape
    layer_in = x
    for (w_ih, w_hh, b_ih, b_hh) in params["lstm"]:
        H = w_hh.shape[1]
        h = jnp.zeros((B, H), jnp.float32)
        c = jnp.zeros((B, H), jnp.float32)
        outs = []
        for t in range(T):
            gates = layer_in[:, t, :] @ w_ih.T + h @ w_hh.T + b_ih + b_hh
            i, f, g, o = jnp.split(gates, 4, axis=-1)
            i, f, g, o = jax.nn.sigmoid(i), jax.nn.sigmoid(f), jnp.tanh(g), jax.nn.sigmoid(o)
            c = f * c + i * g
            h = o * jnp.tanh(c)
            outs.append(h)
        layer_in = jnp.stack(outs, axis=1)
    w_fc, b_fc = params["fc"]
    return layer_in[:, -1, :] @ w_fc.T + b_fc


def init_params(key, input_size, hidden_size, num_layers, num_classes):
    k = 1.0 / (hidden_size ** 0.5)
    lstm = []
    for layer in range(num_layers):
        in_l = input_size if layer == 0 else hidden_size
        key, k1, k2, k3, k4 = jax.random.split(key, 5)
        lstm.append((
            jax.random.uniform(k1, (4 * hidden_size, in_l), jnp.float32, -k, k),
            jax.random.uniform(k2, (4 * hidden_size, hidden_size), jnp.float32, -k, k),
            jax.random.uniform(k3, (4 * hidden_size,), jnp.float32, -k, k),
            jax.random.uniform(k4, (4 * hidden_size,), jnp.float32, -k, k),
        ))
    key, k1, k2 = jax.random.split(key, 3)
    fc = (jax.random.uniform(k1, (num_classes, hidden_size), jnp.float32, -k, k),
          jax.random.uniform(k2, (num_classes,), jnp.float32, -k, k))
    return {"lstm": lstm, "fc": fc}


if __name__ == "__main__":
    # Small HAR-like config: batch=4, seq=8, input=16 features, hidden=32, 2 layers, 6 classes.
    B, T, I, H, L, C = 4, 8, 16, 32, 2, 6

    key = jax.random.PRNGKey(0)
    key, kx, kp = jax.random.split(key, 3)
    x = jax.random.normal(kx, (B, T, I), jnp.float32)
    params = init_params(kp, I, H, L, C)

    # One-time weight transform (kept out of the per-call hot path).
    prepped, meta = prepare_params(params)

    out = lstm_har_forward(x, prepped, meta["num_classes"])
    out = jax.block_until_ready(out)

    ref = lstm_har_reference(x, params)
    assert out.shape == (B, C)
    assert jnp.allclose(out, ref, rtol=1e-2, atol=1e-2), (
        f"mismatch: max abs diff = {jnp.max(jnp.abs(out - ref))}")

    print("KERNEL_OK")
</pallas_src>

<mosaic_0001>
module attributes {stable_mosaic.version = 11 : i64} {
  func.func @kernel(%arg0: memref<64x16xbf16, #tpu.memory_space<vmem>>, %arg1: memref<16x128xbf16, #tpu.memory_space<vmem>>, %arg2: memref<128x128xbf16, #tpu.memory_space<vmem>>, %arg3: memref<1x128xf32, #tpu.memory_space<vmem>>, %arg4: memref<128x128xbf16, #tpu.memory_space<vmem>>, %arg5: memref<128x128xbf16, #tpu.memory_space<vmem>>, %arg6: memref<1x128xf32, #tpu.memory_space<vmem>>, %arg7: memref<128x128xf32, #tpu.memory_space<vmem>>, %arg8: memref<1x128xf32, #tpu.memory_space<vmem>>, %arg9: memref<8x128xf32, #tpu.memory_space<vmem>>, %arg10: memref<64x128xf32, #tpu.memory_space<vmem>>) attributes {dimension_semantics = [], scalar_prefetch = 0 : i64, scratch_operands = 1 : i64, tpu.core_type = #tpu.core_type<tc>} {
    %0 = tpu.iota {dimensions = array<i32: 1>} : vector<8x128xi32>
    %c64_i32 = arith.constant 64 : i32
    %1 = vector.broadcast %c64_i32 : i32 to vector<8x128xi32>
    %2 = arith.cmpi sge, %0, %1 : vector<8x128xi32>
    %c96_i32 = arith.constant 96 : i32
    %3 = vector.broadcast %c96_i32 : i32 to vector<8x128xi32>
    %4 = arith.cmpi slt, %0, %3 : vector<8x128xi32>
    %5 = arith.andi %2, %4 : vector<8x128xi1>
    %cst = arith.constant 1.000000e+00 : f32
    %cst_0 = arith.constant 5.000000e-01 : f32
    %6 = vector.broadcast %cst : f32 to vector<8x128xf32>
    %7 = vector.broadcast %cst_0 : f32 to vector<8x128xf32>
    %8 = arith.select %5, %6, %7 : vector<8x128xi1>, vector<8x128xf32>
    %cst_1 = arith.constant 0.000000e+00 : f32
    %cst_2 = arith.constant 5.000000e-01 : f32
    %9 = vector.broadcast %cst_1 : f32 to vector<8x128xf32>
    %10 = vector.broadcast %cst_2 : f32 to vector<8x128xf32>
    %11 = arith.select %5, %9, %10 : vector<8x128xi1>, vector<8x128xf32>
    %c0 = arith.constant 0 : index
    %c0_3 = arith.constant 0 : index
    %12 = vector.load %arg0[%c0, %c0_3] : memref<64x16xbf16, #tpu.memory_space<vmem>>, vector<64x16xbf16>
    %c0_4 = arith.constant 0 : index
    %c0_5 = arith.constant 0 : index
    %13 = vector.load %arg1[%c0_4, %c0_5] : memref<16x128xbf16, #tpu.memory_space<vmem>>, vector<16x128xbf16>
    %cst_6 = arith.constant dense<0.000000e+00> : vector<64x128xf32>
    %14 = tpu.matmul %12, %13, %cst_6 {dimension_numbers = #tpu.dot_dimension_numbers<[1], [0], [0], [1], [0, 0, 1, 1], [], []>} : vector<64x16xbf16>, vector<16x128xbf16>, vector<64x128xf32> -> vector<64x128xf32>
    %c0_7 = arith.constant 0 : index
    %c0_8 = arith.constant 0 : index
    %15 = vector.load %arg3[%c0_7, %c0_8] : memref<1x128xf32, #tpu.memory_space<vmem>>, vector<1x128xf32>
    %16 = vector.broadcast %15 : vector<1x128xf32> to vector<64x128xf32>
    %17 = arith.addf %14, %16 : vector<64x128xf32>
    %c0_9 = arith.constant 0 : index
    %c0_10 = arith.constant 0 : index
    %18 = vector.load %arg10[%c0_9, %c0_10] : memref<64x128xf32, #tpu.memory_space<vmem>>, vector<64x128xf32>
    tpu.vector_store %arg10[%c0_9, %c0_10], %17 {strides = array<i32>} : memref<64x128xf32, #tpu.memory_space<vmem>>, vector<64x128xf32>,
    %c0_11 = arith.constant 0 : index
    %c0_12 = arith.constant 0 : index
    %19 = vector.load %arg2[%c0_11, %c0_12] : memref<128x128xbf16, #tpu.memory_space<vmem>>, vector<128x128xbf16>
    %c0_13 = arith.constant 0 : index
    %c0_14 = arith.constant 0 : index
    %20 = vector.load %arg5[%c0_13, %c0_14] : memref<128x128xbf16, #tpu.memory_space<vmem>>, vector<128x128xbf16>
    %c0_15 = arith.constant 0 : index
    %c0_16 = arith.constant 0 : index
    %21 = vector.load %arg4[%c0_15, %c0_16] : memref<128x128xbf16, #tpu.memory_space<vmem>>, vector<128x128xbf16>
    %c0_17 = arith.constant 0 : index
    %c0_18 = arith.constant 0 : index
    %22 = vector.load %arg6[%c0_17, %c0_18] : memref<1x128xf32, #tpu.memory_space<vmem>>, vector<1x128xf32>
    %23 = vector.shape_cast %22 : vector<1x128xf32> to vector<1x128xf32>
    %24 = vector.broadcast %23 : vector<1x128xf32> to vector<8x128xf32>
    %c0_19 = arith.constant 0 : index
    %c0_20 = arith.constant 0 : index
    %25 = vector.load %arg10[%c0_19, %c0_20] : memref<64x128xf32, #tpu.memory_space<vmem>>, vector<8x128xf32>
    %26 = arith.mulf %25, %8 : vector<8x128xf32>
    %27 = math.tanh %26 : vector<8x128xf32>
    %28 = arith.mulf %27, %8 : vector<8x128xf32>
    %29 = arith.addf %28, %11 : vector<8x128xf32>
    %c64_i32_21 = arith.constant 64 : i32
    %30 = tpu.dynamic_rotate %29 by %c64_i32_21 dim 1 : vector<8x128xf32>, i32 -> vector<8x128xf32>
    %31 = arith.mulf %29, %30 : vector<8x128xf32>
    %c32_i32 = arith.constant 32 : i32
    %32 = tpu.dynamic_rotate %31 by %c32_i32 dim 1 : vector<8x128xf32>, i32 -> vector<8x128xf32>
    %33 = math.tanh %32 : vector<8x128xf32>
    %34 = arith.mulf %30, %33 : vector<8x128xf32>
    %35 = arith.truncf %34 : vector<8x128xf32> to vector<8x128xbf16>
    %cst_22 = arith.constant dense<0.000000e+00> : vector<8x128xf32>
    %36 = tpu.matmul %35, %21, %cst_22 {dimension_numbers = #tpu.dot_dimension_numbers<[1], [0], [0], [1], [0, 0, 1, 1], [], []>} : vector<8x128xbf16>, vector<128x128xbf16>, vector<8x128xf32> -> vector<8x128xf32>
    %37 = arith.addf %36, %24 : vector<8x128xf32>
    %38 = arith.mulf %37, %8 : vector<8x128xf32>
    %39 = math.tanh %38 : vector<8x128xf32>
    %40 = arith.mulf %39, %8 : vector<8x128xf32>
    %41 = arith.addf %40, %11 : vector<8x128xf32>
    %c64_i32_23 = arith.constant 64 : i32
    %42 = tpu.dynamic_rotate %41 by %c64_i32_23 dim 1 : vector<8x128xf32>, i32 -> vector<8x128xf32>
    %43 = arith.mulf %41, %42 : vector<8x128xf32>
    %c32_i32_24 = arith.constant 32 : i32
    %44 = tpu.dynamic_rotate %43 by %c32_i32_24 dim 1 : vector<8x128xf32>, i32 -> vector<8x128xf32>
    %45 = math.tanh %44 : vector<8x128xf32>
    %46 = arith.mulf %42, %45 : vector<8x128xf32>
    %47 = arith.truncf %46 : vector<8x128xf32> to vector<8x128xbf16>
    %c8 = arith.constant 8 : index
    %c0_25 = arith.constant 0 : index
    %48 = vector.load %arg10[%c8, %c0_25] : memref<64x128xf32, #tpu.memory_space<vmem>>, vector<8x128xf32>
    %cst_26 = arith.constant dense<0.000000e+00> : vector<8x128xf32>
    %49 = tpu.matmul %35, %19, %cst_26 {dimension_numbers = #tpu.dot_dimension_numbers<[1], [0], [0], [1], [0, 0, 1, 1], [], []>} : vector<8x128xbf16>, vector<128x128xbf16>, vector<8x128xf32> -> vector<8x128xf32>
    %50 = arith.addf %48, %49 : vector<8x128xf32>
    %51 = arith.mulf %50, %8 : vector<8x128xf32>
    %52 = math.tanh %51 : vector<8x128xf32>
    %53 = arith.mulf %52, %8 : vector<8x128xf32>
    %54 = arith.addf %53, %11 : vector<8x128xf32>
    %c64_i32_27 = arith.constant 64 : i32
    %55 = tpu.dynamic_rotate %54 by %c64_i32_27 dim 1 : vector<8x128xf32>, i32 -> vector<8x128xf32>
    %56 = arith.mulf %54, %55 : vector<8x128xf32>
    %c32_i32_28 = arith.constant 32 : i32
    %57 = tpu.dynamic_rotate %56 by %c32_i32_28 dim 1 : vector<8x128xf32>, i32 -> vector<8x128xf32>
    %58 = arith.mulf %54, %32 : vector<8x128xf32>
    %59 = arith.addf %58, %57 : vector<8x128xf32>
    %60 = math.tanh %59 : vector<8x128xf32>
    %61 = arith.mulf %55, %60 : vector<8x128xf32>
    %62 = arith.truncf %61 : vector<8x128xf32> to vector<8x128xbf16>
    %cst_29 = arith.constant dense<0.000000e+00> : vector<8x128xf32>
    %63 = tpu.matmul %62, %21, %cst_29 {dimension_numbers = #tpu.dot_dimension_numbers<[1], [0], [0], [1], [0, 0, 1, 1], [], []>} : vector<8x128xbf16>, vector<128x128xbf16>, vector<8x128xf32> -> vector<8x128xf32>
    %64 = arith.addf %63, %24 : vector<8x128xf32>
    %cst_30 = arith.constant dense<0.000000e+00> : vector<8x128xf32>
    %65 = tpu.matmul %47, %20, %cst_30 {dimension_numbers = #tpu.dot_dimension_numbers<[1], [0], [0], [1], [0, 0, 1, 1], [], []>} : vector<8x128xbf16>, vector<128x128xbf16>, vector<8x128xf32> -> vector<8x128xf32>
    %66 = arith.addf %64, %65 : vector<8x128xf32>
    %67 = arith.mulf %66, %8 : vector<8x128xf32>
    %68 = math.tanh %67 : vector<8x128xf32>
    %69 = arith.mulf %68, %8 : vector<8x128xf32>
    %70 = arith.addf %69, %11 : vector<8x128xf32>
    %c64_i32_31 = arith.constant 64 : i32
    %71 = tpu.dynamic_rotate %70 by %c64_i32_31 dim 1 : vector<8x128xf32>, i32 -> vector<8x128xf32>
    %72 = arith.mulf %70, %71 : vector<8x128xf32>
    %c32_i32_32 = arith.constant 32 : i32
    %73 = tpu.dynamic_rotate %72 by %c32_i32_32 dim 1 : vector<8x128xf32>, i32 -> vector<8x128xf32>
    %74 = arith.mulf %70, %44 : vector<8x128xf32>
    %75 = arith.addf %74, %73 : vector<8x128xf32>
    %76 = math.tanh %75 : vector<8x128xf32>
    %77 = arith.mulf %71, %76 : vector<8x128xf32>
    %78 = arith.truncf %77 : vector<8x128xf32> to vector<8x128xbf16>
    %c16 = arith.constant 16 : index
    %c0_33 = arith.constant 0 : index
    %79 = vector.load %arg10[%c16, %c0_33] : memref<64x128xf32, #tpu.memory_space<vmem>>, vector<8x128xf32>
    %cst_34 = arith.constant dense<0.000000e+00> : vector<8x128xf32>
    %80 = tpu.matmul %62, %19, %cst_34 {dimension_numbers = #tpu.dot_dimension_numbers<[1], [0], [0], [1], [0, 0, 1, 1], [], []>} : vector<8x128xbf16>, vector<128x128xbf16>, vector<8x128xf32> -> vector<8x128xf32>
    %81 = arith.addf %79, %80 : vector<8x128xf32>
    %82 = arith.mulf %81, %8 : vector<8x128xf32>
    %83 = math.tanh %82 : vector<8x128xf32>
    %84 = arith.mulf %83, %8 : vector<8x128xf32>
    %85 = arith.addf %84, %11 : vector<8x128xf32>
    %c64_i32_35 = arith.constant 64 : i32
    %86 = tpu.dynamic_rotate %85 by %c64_i32_35 dim 1 : vector<8x128xf32>, i32 -> vector<8x128xf32>
    %87 = arith.mulf %85, %86 : vector<8x128xf32>
    %c32_i32_36 = arith.constant 32 : i32
    %88 = tpu.dynamic_rotate %87 by %c32_i32_36 dim 1 : vector<8x128xf32>, i32 -> vector<8x128xf32>
    %89 = arith.mulf %85, %59 : vector<8x128xf32>
    %90 = arith.addf %89, %88 : vector<8x128xf32>
    %91 = math.tanh %90 : vector<8x128xf32>
    %92 = arith.mulf %86, %91 : vector<8x128xf32>
    %93 = arith.truncf %92 : vector<8x128xf32> to vector<8x128xbf16>
    %cst_37 = arith.constant dense<0.000000e+00> : vector<8x128xf32>
    %94 = tpu.matmul %93, %21, %cst_37 {dimension_numbers = #tpu.dot_dimension_numbers<[1], [0], [0], [1], [0, 0, 1, 1], [], []>} : vector<8x128xbf16>, vector<128x128xbf16>, vector<8x128xf32> -> vector<8x128xf32>
    %95 = arith.addf %94, %24 : vector<8x128xf32>
    %cst_38 = arith.constant dense<0.000000e+00> : vector<8x128xf32>
    %96 = tpu.matmul %78, %20, %cst_38 {dimension_numbers = #tpu.dot_dimension_numbers<[1], [0], [0], [1], [0, 0, 1, 1], [], []>} : vector<8x128xbf16>, vector<128x128xbf16>, vector<8x128xf32> -> vector<8x128xf32>
    %97 = arith.addf %95, %96 : vector<8x128xf32>
    %98 = arith.mulf %97, %8 : vector<8x128xf32>
    %99 = math.tanh %98 : vector<8x128xf32>
    %100 = arith.mulf %99, %8 : vector<8x128xf32>
    %101 = arith.addf %100, %11 : vector<8x128xf32>
    %c64_i32_39 = arith.constant 64 : i32
    %102 = tpu.dynamic_rotate %101 by %c64_i32_39 dim 1 : vector<8x128xf32>, i32 -> vector<8x128xf32>
    %103 = arith.mulf %101, %102 : vector<8x128xf32>
    %c32_i32_40 = arith.constant 32 : i32
    %104 = tpu.dynamic_rotate %103 by %c32_i32_40 dim 1 : vector<8x128xf32>, i32 -> vector<8x128xf32>
    %105 = arith.mulf %101, %75 : vector<8x128xf32>
    %106 = arith.addf %105, %104 : vector<8x128xf32>
    %107 = math.tanh %106 : vector<8x128xf32>
    %108 = arith.mulf %102, %107 : vector<8x128xf32>
    %109 = arith.truncf %108 : vector<8x128xf32> to vector<8x128xbf16>
    %c24 = arith.constant 24 : index
    %c0_41 = arith.constant 0 : index
    %110 = vector.load %arg10[%c24, %c0_41] : memref<64x128xf32, #tpu.memory_space<vmem>>, vector<8x128xf32>
    %cst_42 = arith.constant dense<0.000000e+00> : vector<8x128xf32>
    %111 = tpu.matmul %93, %19, %cst_42 {dimension_numbers = #tpu.dot_dimension_numbers<[1], [0], [0], [1], [0, 0, 1, 1], [], []>} : vector<8x128xbf16>, vector<128x128xbf16>, vector<8x128xf32> -> vector<8x128xf32>
    %112 = arith.addf %110, %111 : vector<8x128xf32>
    %113 = arith.mulf %112, %8 : vector<8x128xf32>
    %114 = math.tanh %113 : vector<8x128xf32>
    %115 = arith.mulf %114, %8 : vector<8x128xf32>
    %116 = arith.addf %115, %11 : vector<8x128xf32>
    %c64_i32_43 = arith.constant 64 : i32
    %117 = tpu.dynamic_rotate %116 by %c64_i32_43 dim 1 : vector<8x128xf32>, i32 -> vector<8x128xf32>
    %118 = arith.mulf %116, %117 : vector<8x128xf32>
    %c32_i32_44 = arith.constant 32 : i32
    %119 = tpu.dynamic_rotate %118 by %c32_i32_44 dim 1 : vector<8x128xf32>, i32 -> vector<8x128xf32>
    %120 = arith.mulf %116, %90 : vector<8x128xf32>
    %121 = arith.addf %120, %119 : vector<8x128xf32>
    %122 = math.tanh %121 : vector<8x128xf32>
    %123 = arith.mulf %117, %122 : vector<8x128xf32>
    %124 = arith.truncf %123 : vector<8x128xf32> to vector<8x128xbf16>
    %cst_45 = arith.constant dense<0.000000e+00> : vector<8x128xf32>
    %125 = tpu.matmul %124, %21, %cst_45 {dimension_numbers = #tpu.dot_dimension_numbers<[1], [0], [0], [1], [0, 0, 1, 1], [], []>} : vector<8x128xbf16>, vector<128x128xbf16>, vector<8x128xf32> -> vector<8x128xf32>
    %126 = arith.addf %125, %24 : vector<8x128xf32>
    %cst_46 = arith.constant dense<0.000000e+00> : vector<8x128xf32>
    %127 = tpu.matmul %109, %20, %cst_46 {dimension_numbers = #tpu.dot_dimension_numbers<[1], [0], [0], [1], [0, 0, 1, 1], [], []>} : vector<8x128xbf16>, vector<128x128xbf16>, vector<8x128xf32> -> vector<8x128xf32>
    %128 = arith.addf %126, %127 : vector<8x128xf32>
    %129 = arith.mulf %128, %8 : vector<8x128xf32>
    %130 = math.tanh %129 : vector<8x128xf32>
    %131 = arith.mulf %130, %8 : vector<8x128xf32>
    %132 = arith.addf %131, %11 : vector<8x128xf32>
    %c64_i32_47 = arith.constant 64 : i32
    %133 = tpu.dynamic_rotate %132 by %c64_i32_47 dim 1 : vector<8x128xf32>, i32 -> vector<8x128xf32>
    %134 = arith.mulf %132, %133 : vector<8x128xf32>
    %c32_i32_48 = arith.constant 32 : i32
    %135 = tpu.dynamic_rotate %134 by %c32_i32_48 dim 1 : vector<8x128xf32>, i32 -> vector<8x128xf32>
    %136 = arith.mulf %132, %106 : vector<8x128xf32>
    %137 = arith.addf %136, %135 : vector<8x128xf32>
    %138 = math.tanh %137 : vector<8x128xf32>
    %139 = arith.mulf %133, %138 : vector<8x128xf32>
    %140 = arith.truncf %139 : vector<8x128xf32> to vector<8x128xbf16>
    %c32 = arith.constant 32 : index
    %c0_49 = arith.constant 0 : index
    %141 = vector.load %arg10[%c32, %c0_49] : memref<64x128xf32, #tpu.memory_space<vmem>>, vector<8x128xf32>
    %cst_50 = arith.constant dense<0.000000e+00> : vector<8x128xf32>
    %142 = tpu.matmul %124, %19, %cst_50 {dimension_numbers = #tpu.dot_dimension_numbers<[1], [0], [0], [1], [0, 0, 1, 1], [], []>} : vector<8x128xbf16>, vector<128x128xbf16>, vector<8x128xf32> -> vector<8x128xf32>
    %143 = arith.addf %141, %142 : vector<8x128xf32>
    %144 = arith.mulf %143, %8 : vector<8x128xf32>
    %145 = math.tanh %144 : vector<8x128xf32>
    %146 = arith.mulf %145, %8 : vector<8x128xf32>
    %147 = arith.addf %146, %11 : vector<8x128xf32>
    %c64_i32_51 = arith.constant 64 : i32
    %148 = tpu.dynamic_rotate %147 by %c64_i32_51 dim 1 : vector<8x128xf32>, i32 -> vector<8x128xf32>
    %149 = arith.mulf %147, %148 : vector<8x128xf32>
    %c32_i32_52 = arith.constant 32 : i32
    %150 = tpu.dynamic_rotate %149 by %c32_i32_52 dim 1 : vector<8x128xf32>, i32 -> vector<8x128xf32>
    %151 = arith.mulf %147, %121 : vector<8x128xf32>
    %152 = arith.addf %151, %150 : vector<8x128xf32>
    %153 = math.tanh %152 : vector<8x128xf32>
    %154 = arith.mulf %148, %153 : vector<8x128xf32>
    %155 = arith.truncf %154 : vector<8x128xf32> to vector<8x128xbf16>
    %cst_53 = arith.constant dense<0.000000e+00> : vector<8x128xf32>
    %156 = tpu.matmul %155, %21, %cst_53 {dimension_numbers = #tpu.dot_dimension_numbers<[1], [0], [0], [1], [0, 0, 1, 1], [], []>} : vector<8x128xbf16>, vector<128x128xbf16>, vector<8x128xf32> -> vector<8x128xf32>
    %157 = arith.addf %156, %24 : vector<8x128xf32>
    %cst_54 = arith.constant dense<0.000000e+00> : vector<8x128xf32>
    %158 = tpu.matmul %140, %20, %cst_54 {dimension_numbers = #tpu.dot_dimension_numbers<[1], [0], [0], [1], [0, 0, 1, 1], [], []>} : vector<8x128xbf16>, vector<128x128xbf16>, vector<8x128xf32> -> vector<8x128xf32>
    %159 = arith.addf %157, %158 : vector<8x128xf32>
    %160 = arith.mulf %159, %8 : vector<8x128xf32>
    %161 = math.tanh %160 : vector<8x128xf32>
    %162 = arith.mulf %161, %8 : vector<8x128xf32>
    %163 = arith.addf %162, %11 : vector<8x128xf32>
    %c64_i32_55 = arith.constant 64 : i32
    %164 = tpu.dynamic_rotate %163 by %c64_i32_55 dim 1 : vector<8x128xf32>, i32 -> vector<8x128xf32>
    %165 = arith.mulf %163, %164 : vector<8x128xf32>
    %c32_i32_56 = arith.constant 32 : i32
    %166 = tpu.dynamic_rotate %165 by %c32_i32_56 dim 1 : vector<8x128xf32>, i32 -> vector<8x128xf32>
    %167 = arith.mulf %163, %137 : vector<8x128xf32>
    %168 = arith.addf %167, %166 : vector<8x128xf32>
    %169 = math.tanh %168 : vector<8x128xf32>
    %170 = arith.mulf %164, %169 : vector<8x128xf32>
    %171 = arith.truncf %170 : vector<8x128xf32> to vector<8x128xbf16>
    %c40 = arith.constant 40 : index
    %c0_57 = arith.constant 0 : index
    %172 = vector.load %arg10[%c40, %c0_57] : memref<64x128xf32, #tpu.memory_space<vmem>>, vector<8x128xf32>
    %cst_58 = arith.constant dense<0.000000e+00> : vector<8x128xf32>
    %173 = tpu.matmul %155, %19, %cst_58 {dimension_numbers = #tpu.dot_dimension_numbers<[1], [0], [0], [1], [0, 0, 1, 1], [], []>} : vector<8x128xbf16>, vector<128x128xbf16>, vector<8x128xf32> -> vector<8x128xf32>
    %174 = arith.addf %172, %173 : vector<8x128xf32>
    %175 = arith.mulf %174, %8 : vector<8x128xf32>
    %176 = math.tanh %175 : vector<8x128xf32>
    %177 = arith.mulf %176, %8 : vector<8x128xf32>
    %178 = arith.addf %177, %11 : vector<8x128xf32>
    %c64_i32_59 = arith.constant 64 : i32
    %179 = tpu.dynamic_rotate %178 by %c64_i32_59 dim 1 : vector<8x128xf32>, i32 -> vector<8x128xf32>
    %180 = arith.mulf %178, %179 : vector<8x128xf32>
    %c32_i32_60 = arith.constant 32 : i32
    %181 = tpu.dynamic_rotate %180 by %c32_i32_60 dim 1 : vector<8x128xf32>, i32 -> vector<8x128xf32>
    %182 = arith.mulf %178, %152 : vector<8x128xf32>
    %183 = arith.addf %182, %181 : vector<8x128xf32>
    %184 = math.tanh %183 : vector<8x128xf32>
    %185 = arith.mulf %179, %184 : vector<8x128xf32>
    %186 = arith.truncf %185 : vector<8x128xf32> to vector<8x128xbf16>
    %cst_61 = arith.constant dense<0.000000e+00> : vector<8x128xf32>
    %187 = tpu.matmul %186, %21, %cst_61 {dimension_numbers = #tpu.dot_dimension_numbers<[1], [0], [0], [1], [0, 0, 1, 1], [], []>} : vector<8x128xbf16>, vector<128x128xbf16>, vector<8x128xf32> -> vector<8x128xf32>
    %188 = arith.addf %187, %24 : vector<8x128xf32>
    %cst_62 = arith.constant dense<0.000000e+00> : vector<8x128xf32>
    %189 = tpu.matmul %171, %20, %cst_62 {dimension_numbers = #tpu.dot_dimension_numbers<[1], [0], [0], [1], [0, 0, 1, 1], [], []>} : vector<8x128xbf16>, vector<128x128xbf16>, vector<8x128xf32> -> vector<8x128xf32>
    %190 = arith.addf %188, %189 : vector<8x128xf32>
    %191 = arith.mulf %190, %8 : vector<8x128xf32>
    %192 = math.tanh %191 : vector<8x128xf32>
    %193 = arith.mulf %192, %8 : vector<8x128xf32>
    %194 = arith.addf %193, %11 : vector<8x128xf32>
    %c64_i32_63 = arith.constant 64 : i32
    %195 = tpu.dynamic_rotate %194 by %c64_i32_63 dim 1 : vector<8x128xf32>, i32 -> vector<8x128xf32>
    %196 = arith.mulf %194, %195 : vector<8x128xf32>
    %c32_i32_64 = arith.constant 32 : i32
    %197 = tpu.dynamic_rotate %196 by %c32_i32_64 dim 1 : vector<8x128xf32>, i32 -> vector<8x128xf32>
    %198 = arith.mulf %194, %168 : vector<8x128xf32>
    %199 = arith.addf %198, %197 : vector<8x128xf32>
    %200 = math.tanh %199 : vector<8x128xf32>
    %201 = arith.mulf %195, %200 : vector<8x128xf32>
    %202 = arith.truncf %201 : vector<8x128xf32> to vector<8x128xbf16>
    %c48 = arith.constant 48 : index
    %c0_65 = arith.constant 0 : index
    %203 = vector.load %arg10[%c48, %c0_65] : memref<64x128xf32, #tpu.memory_space<vmem>>, vector<8x128xf32>
    %cst_66 = arith.constant dense<0.000000e+00> : vector<8x128xf32>
    %204 = tpu.matmul %186, %19, %cst_66 {dimension_numbers = #tpu.dot_dimension_numbers<[1], [0], [0], [1], [0, 0, 1, 1], [], []>} : vector<8x128xbf16>, vector<128x128xbf16>, vector<8x128xf32> -> vector<8x128xf32>
    %205 = arith.addf %203, %204 : vector<8x128xf32>
    %206 = arith.mulf %205, %8 : vector<8x128xf32>
    %207 = math.tanh %206 : vector<8x128xf32>
    %208 = arith.mulf %207, %8 : vector<8x128xf32>
    %209 = arith.addf %208, %11 : vector<8x128xf32>
    %c64_i32_67 = arith.constant 64 : i32
    %210 = tpu.dynamic_rotate %209 by %c64_i32_67 dim 1 : vector<8x128xf32>, i32 -> vector<8x128xf32>
    %211 = arith.mulf %209, %210 : vector<8x128xf32>
    %c32_i32_68 = arith.constant 32 : i32
    %212 = tpu.dynamic_rotate %211 by %c32_i32_68 dim 1 : vector<8x128xf32>, i32 -> vector<8x128xf32>
    %213 = arith.mulf %209, %183 : vector<8x128xf32>
    %214 = arith.addf %213, %212 : vector<8x128xf32>
    %215 = math.tanh %214 : vector<8x128xf32>
    %216 = arith.mulf %210, %215 : vector<8x128xf32>
    %217 = arith.truncf %216 : vector<8x128xf32> to vector<8x128xbf16>
    %cst_69 = arith.constant dense<0.000000e+00> : vector<8x128xf32>
    %218 = tpu.matmul %217, %21, %cst_69 {dimension_numbers = #tpu.dot_dimension_numbers<[1], [0], [0], [1], [0, 0, 1, 1], [], []>} : vector<8x128xbf16>, vector<128x128xbf16>, vector<8x128xf32> -> vector<8x128xf32>
    %219 = arith.addf %218, %24 : vector<8x128xf32>
    %cst_70 = arith.constant dense<0.000000e+00> : vector<8x128xf32>
    %220 = tpu.matmul %202, %20, %cst_70 {dimension_numbers = #tpu.dot_dimension_numbers<[1], [0], [0], [1], [0, 0, 1, 1], [], []>} : vector<8x128xbf16>, vector<128x128xbf16>, vector<8x128xf32> -> vector<8x128xf32>
    %221 = arith.addf %219, %220 : vector<8x128xf32>
    %222 = arith.mulf %221, %8 : vector<8x128xf32>
    %223 = math.tanh %222 : vector<8x128xf32>
    %224 = arith.mulf %223, %8 : vector<8x128xf32>
    %225 = arith.addf %224, %11 : vector<8x128xf32>
    %c64_i32_71 = arith.constant 64 : i32
    %226 = tpu.dynamic_rotate %225 by %c64_i32_71 dim 1 : vector<8x128xf32>, i32 -> vector<8x128xf32>
    %227 = arith.mulf %225, %226 : vector<8x128xf32>
    %c32_i32_72 = arith.constant 32 : i32
    %228 = tpu.dynamic_rotate %227 by %c32_i32_72 dim 1 : vector<8x128xf32>, i32 -> vector<8x128xf32>
    %229 = arith.mulf %225, %199 : vector<8x128xf32>
    %230 = arith.addf %229, %228 : vector<8x128xf32>
    %231 = math.tanh %230 : vector<8x128xf32>
    %232 = arith.mulf %226, %231 : vector<8x128xf32>
    %233 = arith.truncf %232 : vector<8x128xf32> to vector<8x128xbf16>
    %c56 = arith.constant 56 : index
    %c0_73 = arith.constant 0 : index
    %234 = vector.load %arg10[%c56, %c0_73] : memref<64x128xf32, #tpu.memory_space<vmem>>, vector<8x128xf32>
    %cst_74 = arith.constant dense<0.000000e+00> : vector<8x128xf32>
    %235 = tpu.matmul %217, %19, %cst_74 {dimension_numbers = #tpu.dot_dimension_numbers<[1], [0], [0], [1], [0, 0, 1, 1], [], []>} : vector<8x128xbf16>, vector<128x128xbf16>, vector<8x128xf32> -> vector<8x128xf32>
    %236 = arith.addf %234, %235 : vector<8x128xf32>
    %237 = arith.mulf %236, %8 : vector<8x128xf32>
    %238 = math.tanh %237 : vector<8x128xf32>
    %239 = arith.mulf %238, %8 : vector<8x128xf32>
    %240 = arith.addf %239, %11 : vector<8x128xf32>
    %c64_i32_75 = arith.constant 64 : i32
    %241 = tpu.dynamic_rotate %240 by %c64_i32_75 dim 1 : vector<8x128xf32>, i32 -> vector<8x128xf32>
    %242 = arith.mulf %240, %241 : vector<8x128xf32>
    %c32_i32_76 = arith.constant 32 : i32
    %243 = tpu.dynamic_rotate %242 by %c32_i32_76 dim 1 : vector<8x128xf32>, i32 -> vector<8x128xf32>
    %244 = arith.mulf %240, %214 : vector<8x128xf32>
    %245 = arith.addf %244, %243 : vector<8x128xf32>
    %246 = math.tanh %245 : vector<8x128xf32>
    %247 = arith.mulf %241, %246 : vector<8x128xf32>
    %248 = arith.truncf %247 : vector<8x128xf32> to vector<8x128xbf16>
    %cst_77 = arith.constant dense<0.000000e+00> : vector<8x128xf32>
    %249 = tpu.matmul %248, %21, %cst_77 {dimension_numbers = #tpu.dot_dimension_numbers<[1], [0], [0], [1], [0, 0, 1, 1], [], []>} : vector<8x128xbf16>, vector<128x128xbf16>, vector<8x128xf32> -> vector<8x128xf32>
    %250 = arith.addf %249, %24 : vector<8x128xf32>
    %cst_78 = arith.constant dense<0.000000e+00> : vector<8x128xf32>
    %251 = tpu.matmul %233, %20, %cst_78 {dimension_numbers = #tpu.dot_dimension_numbers<[1], [0], [0], [1], [0, 0, 1, 1], [], []>} : vector<8x128xbf16>, vector<128x128xbf16>, vector<8x128xf32> -> vector<8x128xf32>
    %252 = arith.addf %250, %251 : vector<8x128xf32>
    %253 = arith.mulf %252, %8 : vector<8x128xf32>
    %254 = math.tanh %253 : vector<8x128xf32>
    %255 = arith.mulf %254, %8 : vector<8x128xf32>
    %256 = arith.addf %255, %11 : vector<8x128xf32>
    %c64_i32_79 = arith.constant 64 : i32
    %257 = tpu.dynamic_rotate %256 by %c64_i32_79 dim 1 : vector<8x128xf32>, i32 -> vector<8x128xf32>
    %258 = arith.mulf %256, %257 : vector<8x128xf32>
    %c32_i32_80 = arith.constant 32 : i32
    %259 = tpu.dynamic_rotate %258 by %c32_i32_80 dim 1 : vector<8x128xf32>, i32 -> vector<8x128xf32>
    %260 = arith.mulf %256, %230 : vector<8x128xf32>
    %261 = arith.addf %260, %259 : vector<8x128xf32>
    %262 = math.tanh %261 : vector<8x128xf32>
    %263 = arith.mulf %257, %262 : vector<8x128xf32>
    %c0_81 = arith.constant 0 : index
    %c0_82 = arith.constant 0 : index
    %264 = vector.load %arg7[%c0_81, %c0_82] : memref<128x128xf32, #tpu.memory_space<vmem>>, vector<128x128xf32>
    %cst_83 = arith.constant dense<0.000000e+00> : vector<8x128xf32>
    %265 = tpu.matmul %263, %264, %cst_83 {dimension_numbers = #tpu.dot_dimension_numbers<[1], [0], [0], [1], [0, 0, 1, 1], [], []>} : vector<8x128xf32>, vector<128x128xf32>, vector<8x128xf32> -> vector<8x128xf32>
    %c0_84 = arith.constant 0 : index
    %c0_85 = arith.constant 0 : index
    %266 = vector.load %arg8[%c0_84, %c0_85] : memref<1x128xf32, #tpu.memory_space<vmem>>, vector<1x128xf32>
    %267 = vector.broadcast %266 : vector<1x128xf32> to vector<8x128xf32>
    %268 = arith.addf %265, %267 : vector<8x128xf32>
    %c0_86 = arith.constant 0 : index
    %c0_87 = arith.constant 0 : index
    %269 = vector.load %arg9[%c0_86, %c0_87] : memref<8x128xf32, #tpu.memory_space<vmem>>, vector<8x128xf32>
    tpu.vector_store %arg9[%c0_86, %c0_87], %268 {strides = array<i32>} : memref<8x128xf32, #tpu.memory_space<vmem>>, vector<8x128xf32>,
    return
  }
}

</mosaic_0001>

<llo_original>
// kernel: lstm_har_forward.1
$region0: #{lstm_har_forward.1}
  #allocation0 [shape = 'u32[]', space=smem, size = 0x4, offset = 0x4, fixed_abs, tag = 'smem constant byte address 0x4 - core index']
  #allocation1 [shape = 'u32[144,128]{1,0:T(1,128)}', space=vmem, size = 0x12000, scoped, tag = 'internal scratch']
  #allocation2 [shape = 'f32[64,128]{1,0:T(8,128)}', space=vmem, size = 0x8000, scoped, tag = 'scratch operand']
  %s0 = inlined_call_operand.vmem [shape: bf16[64,16], index: 0, kind: input, shape index: {}]
  %s1 = inlined_call_operand.vmem [shape: bf16[16,128], index: 1, kind: input, shape index: {}]
  %s2 = inlined_call_operand.hbm [shape: bf16[128,128], index: 2, kind: input, shape index: {}]
  %s3 = inlined_call_operand.vmem [shape: f32[1,128], index: 3, kind: input, shape index: {}]
  %s4 = inlined_call_operand.hbm [shape: bf16[128,128], index: 4, kind: input, shape index: {}]
  %s5 = inlined_call_operand.hbm [shape: bf16[128,128], index: 5, kind: input, shape index: {}]
  %s6 = inlined_call_operand.vmem [shape: f32[1,128], index: 6, kind: input, shape index: {}]
  %s7 = inlined_call_operand.vmem [shape: f32[128,128], index: 7, kind: input, shape index: {}]
  %s8 = inlined_call_operand.vmem [shape: f32[1,128], index: 8, kind: input, shape index: {}]
  %s9 = inlined_call_operand.vmem [shape: f32[8,128], index: 9, kind: output, shape index: {}]
  %s10 = sld [smem:[#allocation0]]
  $region58: #{lstm_har_forward.1} parent=0
    _
  %s12 = ssub.s32 1, %s10
  %s13 = scalar_select 0, %s12, %s10
  $region1: #{lstm_har_forward.1} parent=0
    #allocation3 [shape = 'u8[32768]{0}', space=vmem, size = 0x8000, scoped, tag = 'input window, operand 2, single buffered']
    #allocation4 [shape = 's32[1]{0}', space=sflag, size = 0x4, scoped, tag = 'scoped memory for lstm_har_forward.1']
    #allocation5 [shape = 'u8[32768]{0}', space=vmem, size = 0x8000, scoped, tag = 'input window, operand 4, single buffered']
    #allocation6 [shape = 's32[1]{0}', space=sflag, size = 0x4, scoped, tag = 'scoped memory for lstm_har_forward.1']
    #allocation7 [shape = 'u8[32768]{0}', space=vmem, size = 0x8000, scoped, tag = 'input window, operand 5, single buffered']
    %14 = vsyncpa [#allocation4], 0
    %15 = vsyncpa [#allocation6], 0
    // Predicated region
    $region2: #{lstm_har_forward.1} parent=1 // pred_check
      _
    $region3: #{lstm_har_forward.1} parent=1 // pred_check_branch
      %17 = sbr.rel (0) target = $region5
    $region4: #{lstm_har_forward.1} parent=1 // pred_region
      _
    $region5: #{lstm_har_forward.1} parent=1 // pred_fallthru
      _
    // Predicated region
    $region6: #{lstm_har_forward.1} parent=1 // pred_check
      _
    $region7: #{lstm_har_forward.1} parent=1 // pred_check_branch
      %19 = sbr.rel (0) target = $region9
    $region8: #{lstm_har_forward.1} parent=1 // pred_region
      _
    $region9: #{lstm_har_forward.1} parent=1 // pred_fallthru
      _
    // Predicated region
    $region10: #{lstm_har_forward.1} parent=1 // pred_check
      _
    $region11: #{lstm_har_forward.1} parent=1 // pred_check_branch
      %21 = sbr.rel (0) target = $region13
    $region12: #{lstm_har_forward.1} parent=1 // pred_region
      %s23 = ssub.s32 1024, 1024
      %24 = vsyncadd [#allocation4], %s23
      %s25 = sshll.u32 [#allocation3], 4
      %s26 = int_to_ptr.vmem [resolvable:$true] %s25
      %31 = dma.hbm_to_vmem [thread:$0]  %s2, 1024, %s26, [#allocation4], 64, 64, 4
    $region13: #{lstm_har_forward.1} parent=1 // pred_fallthru
      _
    // Predicated region
    $region14: #{lstm_har_forward.1} parent=1 // pred_check
      _
    $region15: #{lstm_har_forward.1} parent=1 // pred_check_branch
      %33 = sbr.rel (0) target = $region17
    $region16: #{lstm_har_forward.1} parent=1 // pred_region
      _
    $region17: #{lstm_har_forward.1} parent=1 // pred_fallthru
      _
    // Predicated region
    $region18: #{lstm_har_forward.1} parent=1 // pred_check
      _
    $region19: #{lstm_har_forward.1} parent=1 // pred_check_branch
      %35 = sbr.rel (0) target = $region21
    $region20: #{lstm_har_forward.1} parent=1 // pred_region
      %s37 = ssub.s32 1024, 1024
      %38 = vsyncadd [#allocation6], %s37
      %s39 = sshll.u32 [#allocation5], 4
      %s40 = int_to_ptr.vmem [resolvable:$true] %s39
      %45 = dma.hbm_to_vmem [thread:$0]  %s4, 1024, %s40, [#allocation6], 64, 64, 4
    $region21: #{lstm_har_forward.1} parent=1 // pred_fallthru
      _
    // Predicated region
    $region22: #{lstm_har_forward.1} parent=1 // pred_check
      _
    $region23: #{lstm_har_forward.1} parent=1 // pred_check_branch
      %47 = sbr.rel (0) target = $region25
    $region24: #{lstm_har_forward.1} parent=1 // pred_region
      %s49 = ssub.s32 1024, 1024
      %50 = vsyncadd [#allocation6], %s49
      %s51 = sshll.u32 [#allocation7], 4
      %s52 = int_to_ptr.vmem [resolvable:$true] %s51
      %57 = dma.hbm_to_vmem [thread:$0]  %s5, 1024, %s52, [#allocation6], 64, 64, 4
    $region25: #{lstm_har_forward.1} parent=1 // pred_fallthru
      _
    // Predicated region
    $region26: #{lstm_har_forward.1} parent=1 // pred_check
      _
    $region27: #{lstm_har_forward.1} parent=1 // pred_check_branch
      %59 = sbr.rel (0) target = $region29
    $region28: #{lstm_har_forward.1} parent=1 // pred_region
      _
    $region29: #{lstm_har_forward.1} parent=1 // pred_fallthru
      _
    // Predicated region
    $region30: #{lstm_har_forward.1} parent=1 // pred_check
      _
    $region31: #{lstm_har_forward.1} parent=1 // pred_check_branch
      %61 = sbr.rel (0) target = $region33
    $region32: #{lstm_har_forward.1} parent=1 // pred_region
      _
    $region33: #{lstm_har_forward.1} parent=1 // pred_fallthru
      _
    // Predicated region
    $region34: #{lstm_har_forward.1} parent=1 // pred_check
      _
    $region35: #{lstm_har_forward.1} parent=1 // pred_check_branch
      %63 = sbr.rel (0) target = $region37
    $region36: #{lstm_har_forward.1} parent=1 // pred_region
      _
    $region37: #{lstm_har_forward.1} parent=1 // pred_fallthru
      _
    // Predicated region
    $region38: #{lstm_har_forward.1} parent=1 // pred_check
      _
    $region39: #{lstm_har_forward.1} parent=1 // pred_check_branch
      %65 = sbr.rel (0) target = $region41
    $region40: #{lstm_har_forward.1} parent=1 // pred_region
      %66 = dma.done [#allocation4], 1024
    $region41: #{lstm_har_forward.1} parent=1 // pred_fallthru
      _
    // Predicated region
    $region42: #{lstm_har_forward.1} parent=1 // pred_check
      _
    $region43: #{lstm_har_forward.1} parent=1 // pred_check_branch
      %68 = sbr.rel (0) target = $region45
    $region44: #{lstm_har_forward.1} parent=1 // pred_region
      %69 = dma.done [#allocation6], 1024
    $region45: #{lstm_har_forward.1} parent=1 // pred_fallthru
      _
    // Predicated region
    $region46: #{lstm_har_forward.1} parent=1 // pred_check
      _
    $region47: #{lstm_har_forward.1} parent=1 // pred_check_branch
      %71 = sbr.rel (0) target = $region49
    $region48: #{lstm_har_forward.1} parent=1 // pred_region
      %72 = dma.done [#allocation6], 1024
    $region49: #{lstm_har_forward.1} parent=1 // pred_fallthru
      _
    %v74 = vlaneseq
    %v75 = vand.u32 %v74, 127
    %vm76 = vcmp.ge.s32.totalorder %v75, 64
    %vm77 = vcmp.lt.s32.totalorder %v75, 96
    %vm78 = vmand %vm76, %vm77
    %v79 = vsel %vm78, 1.0, 0.5
    %v80 = vsel %vm78, 0.0, 0.5
    %v81 = vld [vmem:[%s0] sm:$0xf]
    %v82 = vld [vmem:[%s0 + $0x4] sm:$0xf]
    %v83 = vld [vmem:[%s0 + $0x8] sm:$0xf]
    %v84 = vld [vmem:[%s0 + $0xc] sm:$0xf]
    %v85 = vld [vmem:[%s0 + $0x10] sm:$0xf]
    %v86 = vld [vmem:[%s0 + $0x14] sm:$0xf]
    %v87 = vld [vmem:[%s0 + $0x18] sm:$0xf]
    %v88 = vld [vmem:[%s0 + $0x1c] sm:$0xf]
    %v89 = vld [vmem:[%s1] sm:$0xf]
    %v90 = vld [vmem:[%s1 + $0x4] sm:$0xf]
    %v91 = vld [vmem:[%s3] sm:$0x1]
    %v93 = vlaneseq
    %v94 = vshrl.u32 %v93, 7
    %v95 = vsub.s32 0, %v94
    %v96 = vrot.slane %v91, %v95
    %v106 = vunpack.c.l.b16 %v81
    %v107 = vunpack.c.l.b16 %v82
    %v108 = vunpack.c.l.b16 %v83
    %v109 = vunpack.c.l.b16 %v84
    %v110 = vunpack.c.l.b16 %v85
    %v111 = vunpack.c.l.b16 %v86
    %v112 = vunpack.c.l.b16 %v87
    %v113 = vunpack.c.l.b16 %v88
    %v114 = vpack.c.b16 %v107, %v106
    %v115 = vpack.c.b16 %v109, %v108
    %v116 = vpack.c.b16 %v111, %v110
    %v117 = vpack.c.b16 %v113, %v112
    %v120 = vunpack.c.l.b16 %v89
    %v121 = vunpack.c.l.b16 %v90
    %v122 = vpack.c.b16 %v121, %v120
    %vm124 = vcmask 130048
    %v126 = vsel %vm124, %v114, 0
    %v129 = vsel %vm124, %v115, 0
    %v132 = vsel %vm124, %v116, 0
    %v135 = vsel %vm124, %v117, 0
    %137 = vmatprep.subr.bf16.mxu0 0
    %138 = vmatpush1.bf16.msra.mxu0 %v122
    %139 = vmatprep.subr.bf16.mxu0 0
    %140 = vmatpush1.bf16.msra.mxu0 0
    %141 = vmatprep.subr.bf16.mxu0 0
    %142 = vmatpush1.bf16.msra.mxu0 0
    %143 = vmatprep.subr.bf16.mxu0 0
    %144 = vmatpush1.bf16.msra.mxu0 0
    %145 = vmatprep.subr.bf16.mxu0 0
    %146 = vmatpush1.bf16.msra.mxu0 0
    %147 = vmatprep.subr.bf16.mxu0 0
    %148 = vmatpush1.bf16.msra.mxu0 0
    %149 = vmatprep.subr.bf16.mxu0 0
    %150 = vmatpush1.bf16.msra.mxu0 0
    %151 = vmatprep.subr.bf16.mxu0 0
    %152 = vmatpush1.bf16.msra.mxu0 0
    %153 = vmatprep.subr.bf16.mxu0 0
    %154 = vmatpush1.bf16.msra.mxu0 0
    %155 = vmatprep.subr.bf16.mxu0 0
    %156 = vmatpush1.bf16.msra.mxu0 0
    %157 = vmatprep.subr.bf16.mxu0 0
    %158 = vmatpush1.bf16.msra.mxu0 0
    %159 = vmatprep.subr.bf16.mxu0 0
    %160 = vmatpush1.bf16.msra.mxu0 0
    %161 = vmatprep.subr.bf16.mxu0 0
    %162 = vmatpush1.bf16.msra.mxu0 0
    %163 = vmatprep.subr.bf16.mxu0 0
    %164 = vmatpush1.bf16.msra.mxu0 0
    %165 = vmatprep.subr.bf16.mxu0 0
    %166 = vmatpush1.bf16.msra.mxu0 0
    %167 = vmatprep.subr.bf16.mxu0 0
    %168 = vmatpush1.bf16.msra.mxu0 0
    %169 = vmatprep.mubr.bf16.mxu0 0
    %170 = vmatmul.mubr.bf16.gmra.mrb[0].mxu0 %v126
    %v171 = vpop.f32.mrb[0].mxu0
    %v172 = vadd.f32 %v96, %v171
    %v173 = vpop.f32.mrb[0].mxu0
    %v174 = vpop.f32.mrb[0].mxu0
    %v175 = vadd.f32 %v96, %v174
    %v176 = vpop.f32.mrb[0].mxu0
    %177 = vmatprep.mubr.bf16.mxu0 0
    %178 = vmatmul.mubr.bf16.gmra.mrb[0].mxu0 %v129
    %v179 = vpop.f32.mrb[0].mxu0
    %v180 = vadd.f32 %v96, %v179
    %v181 = vpop.f32.mrb[0].mxu0
    %v182 = vpop.f32.mrb[0].mxu0
    %v183 = vadd.f32 %v96, %v182
    %v184 = vpop.f32.mrb[0].mxu0
    %185 = vmatprep.mubr.bf16.mxu0 0
    %186 = vmatmul.mubr.bf16.gmra.mrb[0].mxu0 %v132
    %v187 = vpop.f32.mrb[0].mxu0
    %v188 = vadd.f32 %v96, %v187
    %v189 = vpop.f32.mrb[0].mxu0
    %v190 = vpop.f32.mrb[0].mxu0
    %v191 = vadd.f32 %v96, %v190
    %v192 = vpop.f32.mrb[0].mxu0
    %193 = vmatprep.mubr.bf16.mxu0 0
    %194 = vmatmul.mubr.bf16.gmra.mrb[0].mxu0 %v135
    %v195 = vpop.f32.mrb[0].mxu0
    %v196 = vadd.f32 %v96, %v195
    %v197 = vpop.f32.mrb[0].mxu0
    %v198 = vpop.f32.mrb[0].mxu0
    %v199 = vadd.f32 %v96, %v198
    %v200 = vpop.f32.mrb[0].mxu0
    %201 = vdwg.mxu0
    %202 = vst [vmem:[#allocation2] sm:$0xff] %v172
    %203 = vst [vmem:[#allocation2 + $0x8] sm:$0xff] %v175
    %204 = vst [vmem:[#allocation2 + $0x10] sm:$0xff] %v180
    %205 = vst [vmem:[#allocation2 + $0x18] sm:$0xff] %v183
    %206 = vst [vmem:[#allocation2 + $0x20] sm:$0xff] %v188
    %207 = vst [vmem:[#allocation2 + $0x28] sm:$0xff] %v191
    %208 = vst [vmem:[#allocation2 + $0x30] sm:$0xff] %v196
    %209 = vst [vmem:[#allocation2 + $0x38] sm:$0xff] %v199
    %v210 = vld [vmem:[#allocation3] sm:$0xf]
    %v211 = vld [vmem:[#allocation3 + $0x4] sm:$0xf]
    %v212 = vld [vmem:[#allocation3 + $0x8] sm:$0xf]
    %v213 = vld [vmem:[#allocation3 + $0xc] sm:$0xf]
    %v214 = vld [vmem:[#allocation3 + $0x10] sm:$0xf]
    %v215 = vld [vmem:[#allocation3 + $0x14] sm:$0xf]
    %v216 = vld [vmem:[#allocation3 + $0x18] sm:$0xf]
    %v217 = vld [vmem:[#allocation3 + $0x1c] sm:$0xf]
    %v218 = vld [vmem:[#allocation3 + $0x20] sm:$0xf]
    %v219 = vld [vmem:[#allocation3 + $0x24] sm:$0xf]
    %v220 = vld [vmem:[#allocation3 + $0x28] sm:$0xf]
    %v221 = vld [vmem:[#allocation3 + $0x2c] sm:$0xf]
    %v222 = vld [vmem:[#allocation3 + $0x30] sm:$0xf]
    %v223 = vld [vmem:[#allocation3 + $0x34] sm:$0xf]
    %v224 = vld [vmem:[#allocation3 + $0x38] sm:$0xf]
    %v225 = vld [vmem:[#allocation3 + $0x3c] sm:$0xf]
    %v226 = vld [vmem:[#allocation7] sm:$0xf]
    %v227 = vld [vmem:[#allocation7 + $0x4] sm:$0xf]
    %v228 = vld [vmem:[#allocation7 + $0x8] sm:$0xf]
    %v229 = vld [vmem:[#allocation7 + $0xc] sm:$0xf]
    %v230 = vld [vmem:[#allocation7 + $0x10] sm:$0xf]
    %v231 = vld [vmem:[#allocation7 + $0x14] sm:$0xf]
    %v232 = vld [vmem:[#allocation7 + $0x18] sm:$0xf]
    %v233 = vld [vmem:[#allocation7 + $0x1c] sm:$0xf]
    %v234 = vld [vmem:[#allocation7 + $0x20] sm:$0xf]
    %v235 = vld [vmem:[#allocation7 + $0x24] sm:$0xf]
    %v236 = vld [vmem:[#allocation7 + $0x28] sm:$0xf]
    %v237 = vld [vmem:[#allocation7 + $0x2c] sm:$0xf]
    %v238 = vld [vmem:[#allocation7 + $0x30] sm:$0xf]
    %v239 = vld [vmem:[#allocation7 + $0x34] sm:$0xf]
    %v240 = vld [vmem:[#allocation7 + $0x38] sm:$0xf]
    %v241 = vld [vmem:[#allocation7 + $0x3c] sm:$0xf]
    %v242 = vld [vmem:[#allocation5] sm:$0xf]
    %v243 = vld [vmem:[#allocation5 + $0x4] sm:$0xf]
    %v244 = vld [vmem:[#allocation5 + $0x8] sm:$0xf]
    %v245 = vld [vmem:[#allocation5 + $0xc] sm:$0xf]
    %v246 = vld [vmem:[#allocation5 + $0x10] sm:$0xf]
    %v247 = vld [vmem:[#allocation5 + $0x14] sm:$0xf]
    %v248 = vld [vmem:[#allocation5 + $0x18] sm:$0xf]
    %v249 = vld [vmem:[#allocation5 + $0x1c] sm:$0xf]
    %v250 = vld [vmem:[#allocation5 + $0x20] sm:$0xf]
    %v251 = vld [vmem:[#allocation5 + $0x24] sm:$0xf]
    %v252 = vld [vmem:[#allocation5 + $0x28] sm:$0xf]
    %v253 = vld [vmem:[#allocation5 + $0x2c] sm:$0xf]
    %v254 = vld [vmem:[#allocation5 + $0x30] sm:$0xf]
    %v255 = vld [vmem:[#allocation5 + $0x34] sm:$0xf]
    %v256 = vld [vmem:[#allocation5 + $0x38] sm:$0xf]
    %v257 = vld [vmem:[#allocation5 + $0x3c] sm:$0xf]
    %v258 = vld [vmem:[%s6] sm:$0x1]
    %v260 = vlaneseq
    %v261 = vshrl.u32 %v260, 7
    %v262 = vsub.s32 0, %v261
    %v263 = vrot.slane %v258, %v262
    %v265 = vld [vmem:[#allocation2] sm:$0xff]
    %v266 = vmul.f32 %v265, %v79
    %v267 = vtanh.pop %v266
    %v268 = vmul.f32 %v267, %v79
    %v269 = vadd.f32 %v268, %v80
    %270 = vrot.lane.b32.xlu0 %v269, 64
    %v271 = vpop.permute.xlu0 %270
    %v272 = vmul.f32 %v269, %v271
    %273 = vrot.lane.b32.xlu0 %v272, 32
    %v274 = vpop.permute.xlu0 %273
    %v275 = vtanh.pop %v274
    %v276 = vmul.f32 %v271, %v275
    %v277 = vpack.c.bf16 %v276, %v276
    %v294 = vunpack.c.l.b16 %v242
    %v295 = vunpack.c.l.b16 %v243
    %v296 = vunpack.c.l.b16 %v244
    %v297 = vunpack.c.l.b16 %v245
    %v298 = vunpack.c.l.b16 %v246
    %v299 = vunpack.c.l.b16 %v247
    %v300 = vunpack.c.l.b16 %v248
    %v301 = vunpack.c.l.b16 %v249
    %v302 = vunpack.c.l.b16 %v250
    %v303 = vunpack.c.l.b16 %v251
    %v304 = vunpack.c.l.b16 %v252
    %v305 = vunpack.c.l.b16 %v253
    %v306 = vunpack.c.l.b16 %v254
    %v307 = vunpack.c.l.b16 %v255
    %v308 = vunpack.c.l.b16 %v256
    %v309 = vunpack.c.l.b16 %v257
    %v310 = vpack.c.b16 %v295, %v294
    %v311 = vpack.c.b16 %v297, %v296
    %v312 = vpack.c.b16 %v299, %v298
    %v313 = vpack.c.b16 %v301, %v300
    %v314 = vpack.c.b16 %v303, %v302
    %v315 = vpack.c.b16 %v305, %v304
    %v316 = vpack.c.b16 %v307, %v306
    %v317 = vpack.c.b16 %v309, %v308
    %326 = vmatprep.subr.bf16.mxu0 0
    %327 = vmatpush1.bf16.msra.mxu0 %v310
    %328 = vmatprep.subr.bf16.mxu0 0
    %329 = vmatpush1.bf16.msra.mxu0 %v311
    %330 = vmatprep.subr.bf16.mxu0 0
    %331 = vmatpush1.bf16.msra.mxu0 %v312
    %332 = vmatprep.subr.bf16.mxu0 0
    %333 = vmatpush1.bf16.msra.mxu0 %v313
    %334 = vmatprep.subr.bf16.mxu0 0
    %335 = vmatpush1.bf16.msra.mxu0 %v314
    %336 = vmatprep.subr.bf16.mxu0 0
    %337 = vmatpush1.bf16.msra.mxu0 %v315
    %338 = vmatprep.subr.bf16.mxu0 0
    %339 = vmatpush1.bf16.msra.mxu0 %v316
    %340 = vmatprep.subr.bf16.mxu0 0
    %341 = vmatpush1.bf16.msra.mxu0 %v317
    %342 = vmatprep.subr.bf16.mxu0 0
    %343 = vmatpush1.bf16.msra.mxu0 0
    %344 = vmatprep.subr.bf16.mxu0 0
    %345 = vmatpush1.bf16.msra.mxu0 0
    %346 = vmatprep.subr.bf16.mxu0 0
    %347 = vmatpush1.bf16.msra.mxu0 0
    %348 = vmatprep.subr.bf16.mxu0 0
    %349 = vmatpush1.bf16.msra.mxu0 0
    %350 = vmatprep.subr.bf16.mxu0 0
    %351 = vmatpush1.bf16.msra.mxu0 0
    %352 = vmatprep.subr.bf16.mxu0 0
    %353 = vmatpush1.bf16.msra.mxu0 0
    %354 = vmatprep.subr.bf16.mxu0 0
    %355 = vmatpush1.bf16.msra.mxu0 0
    %356 = vmatprep.subr.bf16.mxu0 0
    %357 = vmatpush1.bf16.msra.mxu0 0
    %358 = vmatprep.mubr.bf16.mxu0 0
    %359 = vmatmul.mubr.bf16.gmra.mrb[0].mxu0 %v277
    %v360 = vpop.f32.mrb[0].mxu0
    %v361 = vadd.f32 %v263, %v360
    %v362 = vpop.f32.mrb[0].mxu0
    %v363 = vpop.f32.mrb[0].mxu0
    %v364 = vpop.f32.mrb[0].mxu0
    %365 = vdwg.mxu0
    %v366 = vmul.f32 %v361, %v79
    %v367 = vtanh.pop %v366
    %v368 = vmul.f32 %v367, %v79
    %v369 = vadd.f32 %v368, %v80
    %370 = vrot.lane.b32.xlu0 %v369, 64
    %v371 = vpop.permute.xlu0 %370
    %v372 = vmul.f32 %v369, %v371
    %373 = vrot.lane.b32.xlu0 %v372, 32
    %v374 = vpop.permute.xlu0 %373
    %v375 = vtanh.pop %v374
    %v376 = vmul.f32 %v371, %v375
    %v377 = vpack.c.bf16 %v376, %v376
    %v378 = vld [vmem:[#allocation2 + $0x8] sm:$0xff]
    %v395 = vunpack.c.l.b16 %v210
    %v396 = vunpack.c.l.b16 %v211
    %v397 = vunpack.c.l.b16 %v212
    %v398 = vunpack.c.l.b16 %v213
    %v399 = vunpack.c.l.b16 %v214
    %v400 = vunpack.c.l.b16 %v215
    %v401 = vunpack.c.l.b16 %v216
    %v402 = vunpack.c.l.b16 %v217
    %v403 = vunpack.c.l.b16 %v218
    %v404 = vunpack.c.l.b16 %v219
    %v405 = vunpack.c.l.b16 %v220
    %v406 = vunpack.c.l.b16 %v221
    %v407 = vunpack.c.l.b16 %v222
    %v408 = vunpack.c.l.b16 %v223
    %v409 = vunpack.c.l.b16 %v224
    %v410 = vunpack.c.l.b16 %v225
    %v411 = vpack.c.b16 %v396, %v395
    %v412 = vpack.c.b16 %v398, %v397
    %v413 = vpack.c.b16 %v400, %v399
    %v414 = vpack.c.b16 %v402, %v401
    %v415 = vpack.c.b16 %v404, %v403
    %v416 = vpack.c.b16 %v406, %v405
    %v417 = vpack.c.b16 %v408, %v407
    %v418 = vpack.c.b16 %v410, %v409
    %427 = vmatprep.subr.bf16.mxu0 0
    %428 = vmatpush1.bf16.msra.mxu0 %v411
    %429 = vmatprep.subr.bf16.mxu0 0
    %430 = vmatpush1.bf16.msra.mxu0 %v412
    %431 = vmatprep.subr.bf16.mxu0 0
    %432 = vmatpush1.bf16.msra.mxu0 %v413
    %433 = vmatprep.subr.bf16.mxu0 0
    %434 = vmatpush1.bf16.msra.mxu0 %v414
    %435 = vmatprep.subr.bf16.mxu0 0
    %436 = vmatpush1.bf16.msra.mxu0 %v415
    %437 = vmatprep.subr.bf16.mxu0 0
    %438 = vmatpush1.bf16.msra.mxu0 %v416
    %439 = vmatprep.subr.bf16.mxu0 0
    %440 = vmatpush1.bf16.msra.mxu0 %v417
    %441 = vmatprep.subr.bf16.mxu0 0
    %442 = vmatpush1.bf16.msra.mxu0 %v418
    %443 = vmatprep.subr.bf16.mxu0 0
    %444 = vmatpush1.bf16.msra.mxu0 0
    %445 = vmatprep.subr.bf16.mxu0 0
    %446 = vmatpush1.bf16.msra.mxu0 0
    %447 = vmatprep.subr.bf16.mxu0 0
    %448 = vmatpush1.bf16.msra.mxu0 0
    %449 = vmatprep.subr.bf16.mxu0 0
    %450 = vmatpush1.bf16.msra.mxu0 0
    %451 = vmatprep.subr.bf16.mxu0 0
    %452 = vmatpush1.bf16.msra.mxu0 0
    %453 = vmatprep.subr.bf16.mxu0 0
    %454 = vmatpush1.bf16.msra.mxu0 0
    %455 = vmatprep.subr.bf16.mxu0 0
    %456 = vmatpush1.bf16.msra.mxu0 0
    %457 = vmatprep.subr.bf16.mxu0 0
    %458 = vmatpush1.bf16.msra.mxu0 0
    %459 = vmatprep.mubr.bf16.mxu0 0
    %460 = vmatmul.mubr.bf16.gmra.mrb[0].mxu0 %v277
    %v461 = vpop.f32.mrb[0].mxu0
    %v462 = vadd.f32 0.0, %v461
    %v463 = vpop.f32.mrb[0].mxu0
    %v464 = vpop.f32.mrb[0].mxu0
    %v465 = vpop.f32.mrb[0].mxu0
    %466 = vdwg.mxu0
    %v467 = vadd.f32 %v378, %v462
    %v468 = vmul.f32 %v467, %v79
    %v469 = vtanh.pop %v468
    %v470 = vmul.f32 %v469, %v79
    %v471 = vadd.f32 %v470, %v80
    %472 = vrot.lane.b32.xlu0 %v471, 64
    %v473 = vpop.permute.xlu0 %472
    %v474 = vmul.f32 %v471, %v473
    %475 = vrot.lane.b32.xlu0 %v474, 32
    %v476 = vpop.permute.xlu0 %475
    %v477 = vmul.f32 %v471, %v274
    %v478 = vadd.f32 %v477, %v476
    %v479 = vtanh.pop %v478
    %v480 = vmul.f32 %v473, %v479
    %v481 = vpack.c.bf16 %v480, %v480
    %482 = vmatprep.subr.bf16.mxu0 0
    %483 = vmatpush1.bf16.msra.mxu0 %v310
    %484 = vmatprep.subr.bf16.mxu0 0
    %485 = vmatpush1.bf16.msra.mxu0 %v311
    %486 = vmatprep.subr.bf16.mxu0 0
    %487 = vmatpush1.bf16.msra.mxu0 %v312
    %488 = vmatprep.subr.bf16.mxu0 0
    %489 = vmatpush1.bf16.msra.mxu0 %v313
    %490 = vmatprep.subr.bf16.mxu0 0
    %491 = vmatpush1.bf16.msra.mxu0 %v314
    %492 = vmatprep.subr.bf16.mxu0 0
    %493 = vmatpush1.bf16.msra.mxu0 %v315
    %494 = vmatprep.subr.bf16.mxu0 0
    %495 = vmatpush1.bf16.msra.mxu0 %v316
    %496 = vmatprep.subr.bf16.mxu0 0
    %497 = vmatpush1.bf16.msra.mxu0 %v317
    %498 = vmatprep.subr.bf16.mxu0 0
    %499 = vmatpush1.bf16.msra.mxu0 0
    %500 = vmatprep.subr.bf16.mxu0 0
    %501 = vmatpush1.bf16.msra.mxu0 0
    %502 = vmatprep.subr.bf16.mxu0 0
    %503 = vmatpush1.bf16.msra.mxu0 0
    %504 = vmatprep.subr.bf16.mxu0 0
    %505 = vmatpush1.bf16.msra.mxu0 0
    %506 = vmatprep.subr.bf16.mxu0 0
    %507 = vmatpush1.bf16.msra.mxu0 0
    %508 = vmatprep.subr.bf16.mxu0 0
    %509 = vmatpush1.bf16.msra.mxu0 0
    %510 = vmatprep.subr.bf16.mxu0 0
    %511 = vmatpush1.bf16.msra.mxu0 0
    %512 = vmatprep.subr.bf16.mxu0 0
    %513 = vmatpush1.bf16.msra.mxu0 0
    %514 = vmatprep.mubr.bf16.mxu0 0
    %515 = vmatmul.mubr.bf16.gmra.mrb[0].mxu0 %v481
    %v516 = vpop.f32.mrb[0].mxu0
    %v517 = vadd.f32 %v263, %v516
    %v518 = vpop.f32.mrb[0].mxu0
    %v519 = vpop.f32.mrb[0].mxu0
    %v520 = vpop.f32.mrb[0].mxu0
    %521 = vdwg.mxu0
    %v538 = vunpack.c.l.b16 %v226
    %v539 = vunpack.c.l.b16 %v227
    %v540 = vunpack.c.l.b16 %v228
    %v541 = vunpack.c.l.b16 %v229
    %v542 = vunpack.c.l.b16 %v230
    %v543 = vunpack.c.l.b16 %v231
    %v544 = vunpack.c.l.b16 %v232
    %v545 = vunpack.c.l.b16 %v233
    %v546 = vunpack.c.l.b16 %v234
    %v547 = vunpack.c.l.b16 %v235
    %v548 = vunpack.c.l.b16 %v236
    %v549 = vunpack.c.l.b16 %v237
    %v550 = vunpack.c.l.b16 %v238
    %v551 = vunpack.c.l.b16 %v239
    %v552 = vunpack.c.l.b16 %v240
    %v553 = vunpack.c.l.b16 %v241
    %v554 = vpack.c.b16 %v539, %v538
    %v555 = vpack.c.b16 %v541, %v540
    %v556 = vpack.c.b16 %v543, %v542
    %v557 = vpack.c.b16 %v545, %v544
    %v558 = vpack.c.b16 %v547, %v546
    %v559 = vpack.c.b16 %v549, %v548
    %v560 = vpack.c.b16 %v551, %v550
    %v561 = vpack.c.b16 %v553, %v552
    %570 = vmatprep.subr.bf16.mxu0 0
    %571 = vmatpush1.bf16.msra.mxu0 %v554
    %572 = vmatprep.subr.bf16.mxu0 0
    %573 = vmatpush1.bf16.msra.mxu0 %v555
    %574 = vmatprep.subr.bf16.mxu0 0
    %575 = vmatpush1.bf16.msra.mxu0 %v556
    %576 = vmatprep.subr.bf16.mxu0 0
    %577 = vmatpush1.bf16.msra.mxu0 %v557
    %578 = vmatprep.subr.bf16.mxu0 0
    %579 = vmatpush1.bf16.msra.mxu0 %v558
    %580 = vmatprep.subr.bf16.mxu0 0
    %581 = vmatpush1.bf16.msra.mxu0 %v559
    %582 = vmatprep.subr.bf16.mxu0 0
    %583 = vmatpush1.bf16.msra.mxu0 %v560
    %584 = vmatprep.subr.bf16.mxu0 0
    %585 = vmatpush1.bf16.msra.mxu0 %v561
    %586 = vmatprep.subr.bf16.mxu0 0
    %587 = vmatpush1.bf16.msra.mxu0 0
    %588 = vmatprep.subr.bf16.mxu0 0
    %589 = vmatpush1.bf16.msra.mxu0 0
    %590 = vmatprep.subr.bf16.mxu0 0
    %591 = vmatpush1.bf16.msra.mxu0 0
    %592 = vmatprep.subr.bf16.mxu0 0
    %593 = vmatpush1.bf16.msra.mxu0 0
    %594 = vmatprep.subr.bf16.mxu0 0
    %595 = vmatpush1.bf16.msra.mxu0 0
    %596 = vmatprep.subr.bf16.mxu0 0
    %597 = vmatpush1.bf16.msra.mxu0 0
    %598 = vmatprep.subr.bf16.mxu0 0
    %599 = vmatpush1.bf16.msra.mxu0 0
    %600 = vmatprep.subr.bf16.mxu0 0
    %601 = vmatpush1.bf16.msra.mxu0 0
    %602 = vmatprep.mubr.bf16.mxu0 0
    %603 = vmatmul.mubr.bf16.gmra.mrb[0].mxu0 %v377
    %v604 = vpop.f32.mrb[0].mxu0
    %v605 = vadd.f32 0.0, %v604
    %v606 = vpop.f32.mrb[0].mxu0
    %v607 = vpop.f32.mrb[0].mxu0
    %v608 = vpop.f32.mrb[0].mxu0
    %609 = vdwg.mxu0
    %v610 = vadd.f32 %v517, %v605
    %v611 = vmul.f32 %v610, %v79
    %v612 = vtanh.pop %v611
    %v613 = vmul.f32 %v612, %v79
    %v614 = vadd.f32 %v613, %v80
    %615 = vrot.lane.b32.xlu0 %v614, 64
    %v616 = vpop.permute.xlu0 %615
    %v617 = vmul.f32 %v614, %v616
    %618 = vrot.lane.b32.xlu0 %v617, 32
    %v619 = vpop.permute.xlu0 %618
    %v620 = vmul.f32 %v614, %v374
    %v621 = vadd.f32 %v620, %v619
    %v622 = vtanh.pop %v621
    %v623 = vmul.f32 %v616, %v622
    %v624 = vpack.c.bf16 %v623, %v623
    %v625 = vld [vmem:[#allocation2 + $0x10] sm:$0xff]
    %626 = vmatprep.subr.bf16.mxu0 0
    %627 = vmatpush1.bf16.msra.mxu0 %v411
    %628 = vmatprep.subr.bf16.mxu0 0
    %629 = vmatpush1.bf16.msra.mxu0 %v412
    %630 = vmatprep.subr.bf16.mxu0 0
    %631 = vmatpush1.bf16.msra.mxu0 %v413
    %632 = vmatprep.subr.bf16.mxu0 0
    %633 = vmatpush1.bf16.msra.mxu0 %v414
    %634 = vmatprep.subr.bf16.mxu0 0
    %635 = vmatpush1.bf16.msra.mxu0 %v415
    %636 = vmatprep.subr.bf16.mxu0 0
    %637 = vmatpush1.bf16.msra.mxu0 %v416
    %638 = vmatprep.subr.bf16.mxu0 0
    %639 = vmatpush1.bf16.msra.mxu0 %v417
    %640 = vmatprep.subr.bf16.mxu0 0
    %641 = vmatpush1.bf16.msra.mxu0 %v418
    %642 = vmatprep.subr.bf16.mxu0 0
    %643 = vmatpush1.bf16.msra.mxu0 0
    %644 = vmatprep.subr.bf16.mxu0 0
    %645 = vmatpush1.bf16.msra.mxu0 0
    %646 = vmatprep.subr.bf16.mxu0 0
    %647 = vmatpush1.bf16.msra.mxu0 0
    %648 = vmatprep.subr.bf16.mxu0 0
    %649 = vmatpush1.bf16.msra.mxu0 0
    %650 = vmatprep.subr.bf16.mxu0 0
    %651 = vmatpush1.bf16.msra.mxu0 0
    %652 = vmatprep.subr.bf16.mxu0 0
    %653 = vmatpush1.bf16.msra.mxu0 0
    %654 = vmatprep.subr.bf16.mxu0 0
    %655 = vmatpush1.bf16.msra.mxu0 0
    %656 = vmatprep.subr.bf16.mxu0 0
    %657 = vmatpush1.bf16.msra.mxu0 0
    %658 = vmatprep.mubr.bf16.mxu0 0
    %659 = vmatmul.mubr.bf16.gmra.mrb[0].mxu0 %v481
    %v660 = vpop.f32.mrb[0].mxu0
    %v661 = vadd.f32 0.0, %v660
    %v662 = vpop.f32.mrb[0].mxu0
    %v663 = vpop.f32.mrb[0].mxu0
    %v664 = vpop.f32.mrb[0].mxu0
    %665 = vdwg.mxu0
    %v666 = vadd.f32 %v625, %v661
    %v667 = vmul.f32 %v666, %v79
    %v668 = vtanh.pop %v667
    %v669 = vmul.f32 %v668, %v79
    %v670 = vadd.f32 %v669, %v80
    %671 = vrot.lane.b32.xlu0 %v670, 64
    %v672 = vpop.permute.xlu0 %671
    %v673 = vmul.f32 %v670, %v672
    %674 = vrot.lane.b32.xlu0 %v673, 32
    %v675 = vpop.permute.xlu0 %674
    %v676 = vmul.f32 %v670, %v478
    %v677 = vadd.f32 %v676, %v675
    %v678 = vtanh.pop %v677
    %v679 = vmul.f32 %v672, %v678
    %v680 = vpack.c.bf16 %v679, %v679
    %681 = vmatprep.subr.bf16.mxu0 0
    %682 = vmatpush1.bf16.msra.mxu0 %v310
    %683 = vmatprep.subr.bf16.mxu0 0
    %684 = vmatpush1.bf16.msra.mxu0 %v311
    %685 = vmatprep.subr.bf16.mxu0 0
    %686 = vmatpush1.bf16.msra.mxu0 %v312
    %687 = vmatprep.subr.bf16.mxu0 0
    %688 = vmatpush1.bf16.msra.mxu0 %v313
    %689 = vmatprep.subr.bf16.mxu0 0
    %690 = vmatpush1.bf16.msra.mxu0 %v314
    %691 = vmatprep.subr.bf16.mxu0 0
    %692 = vmatpush1.bf16.msra.mxu0 %v315
    %693 = vmatprep.subr.bf16.mxu0 0
    %694 = vmatpush1.bf16.msra.mxu0 %v316
    %695 = vmatprep.subr.bf16.mxu0 0
    %696 = vmatpush1.bf16.msra.mxu0 %v317
    %697 = vmatprep.subr.bf16.mxu0 0
    %698 = vmatpush1.bf16.msra.mxu0 0
    %699 = vmatprep.subr.bf16.mxu0 0
    %700 = vmatpush1.bf16.msra.mxu0 0
    %701 = vmatprep.subr.bf16.mxu0 0
    %702 = vmatpush1.bf16.msra.mxu0 0
    %703 = vmatprep.subr.bf16.mxu0 0
    %704 = vmatpush1.bf16.msra.mxu0 0
    %705 = vmatprep.subr.bf16.mxu0 0
    %706 = vmatpush1.bf16.msra.mxu0 0
    %707 = vmatprep.subr.bf16.mxu0 0
    %708 = vmatpush1.bf16.msra.mxu0 0
    %709 = vmatprep.subr.bf16.mxu0 0
    %710 = vmatpush1.bf16.msra.mxu0 0
    %711 = vmatprep.subr.bf16.mxu0 0
    %712 = vmatpush1.bf16.msra.mxu0 0
    %713 = vmatprep.mubr.bf16.mxu0 0
    %714 = vmatmul.mubr.bf16.gmra.mrb[0].mxu0 %v680
    %v715 = vpop.f32.mrb[0].mxu0
    %v716 = vadd.f32 %v263, %v715
    %v717 = vpop.f32.mrb[0].mxu0
    %v718 = vpop.f32.mrb[0].mxu0
    %v719 = vpop.f32.mrb[0].mxu0
    %720 = vdwg.mxu0
    %721 = vmatprep.subr.bf16.mxu0 0
    %722 = vmatpush1.bf16.msra.mxu0 %v554
    %723 = vmatprep.subr.bf16.mxu0 0
    %724 = vmatpush1.bf16.msra.mxu0 %v555
    %725 = vmatprep.subr.bf16.mxu0 0
    %726 = vmatpush1.bf16.msra.mxu0 %v556
    %727 = vmatprep.subr.bf16.mxu0 0
    %728 = vmatpush1.bf16.msra.mxu0 %v557
    %729 = vmatprep.subr.bf16.mxu0 0
    %730 = vmatpush1.bf16.msra.mxu0 %v558
    %731 = vmatprep.subr.bf16.mxu0 0
    %732 = vmatpush1.bf16.msra.mxu0 %v559
    %733 = vmatprep.subr.bf16.mxu0 0
    %734 = vmatpush1.bf16.msra.mxu0 %v560
    %735 = vmatprep.subr.bf16.mxu0 0
    %736 = vmatpush1.bf16.msra.mxu0 %v561
    %737 = vmatprep.subr.bf16.mxu0 0
    %738 = vmatpush1.bf16.msra.mxu0 0
    %739 = vmatprep.subr.bf16.mxu0 0
    %740 = vmatpush1.bf16.msra.mxu0 0
    %741 = vmatprep.subr.bf16.mxu0 0
    %742 = vmatpush1.bf16.msra.mxu0 0
    %743 = vmatprep.subr.bf16.mxu0 0
    %744 = vmatpush1.bf16.msra.mxu0 0
    %745 = vmatprep.subr.bf16.mxu0 0
    %746 = vmatpush1.bf16.msra.mxu0 0
    %747 = vmatprep.subr.bf16.mxu0 0
    %748 = vmatpush1.bf16.msra.mxu0 0
    %749 = vmatprep.subr.bf16.mxu0 0
    %750 = vmatpush1.bf16.msra.mxu0 0
    %751 = vmatprep.subr.bf16.mxu0 0
    %752 = vmatpush1.bf16.msra.mxu0 0
    %753 = vmatprep.mubr.bf16.mxu0 0
    %754 = vmatmul.mubr.bf16.gmra.mrb[0].mxu0 %v624
    %v755 = vpop.f32.mrb[0].mxu0
    %v756 = vadd.f32 0.0, %v755
    %v757 = vpop.f32.mrb[0].mxu0
    %v758 = vpop.f32.mrb[0].mxu0
    %v759 = vpop.f32.mrb[0].mxu0
    %760 = vdwg.mxu0
    %v761 = vadd.f32 %v716, %v756
    %v762 = vmul.f32 %v761, %v79
    %v763 = vtanh.pop %v762
    %v764 = vmul.f32 %v763, %v79
    %v765 = vadd.f32 %v764, %v80
    %766 = vrot.lane.b32.xlu0 %v765, 64
    %v767 = vpop.permute.xlu0 %766
    %v768 = vmul.f32 %v765, %v767
    %769 = vrot.lane.b32.xlu0 %v768, 32
    %v770 = vpop.permute.xlu0 %769
    %v771 = vmul.f32 %v765, %v621
    %v772 = vadd.f32 %v771, %v770
    %v773 = vtanh.pop %v772
    %v774 = vmul.f32 %v767, %v773
    %v775 = vpack.c.bf16 %v774, %v774
    %v776 = vld [vmem:[#allocation2 + $0x18] sm:$0xff]
    %777 = vmatprep.subr.bf16.mxu0 0
    %778 = vmatpush1.bf16.msra.mxu0 %v411
    %779 = vmatprep.subr.bf16.mxu0 0
    %780 = vmatpush1.bf16.msra.mxu0 %v412
    %781 = vmatprep.subr.bf16.mxu0 0
    %782 = vmatpush1.bf16.msra.mxu0 %v413
    %783 = vmatprep.subr.bf16.mxu0 0
    %784 = vmatpush1.bf16.msra.mxu0 %v414
    %785 = vmatprep.subr.bf16.mxu0 0
    %786 = vmatpush1.bf16.msra.mxu0 %v415
    %787 = vmatprep.subr.bf16.mxu0 0
    %788 = vmatpush1.bf16.msra.mxu0 %v416
    %789 = vmatprep.subr.bf16.mxu0 0
    %790 = vmatpush1.bf16.msra.mxu0 %v417
    %791 = vmatprep.subr.bf16.mxu0 0
    %792 = vmatpush1.bf16.msra.mxu0 %v418
    %793 = vmatprep.subr.bf16.mxu0 0
    %794 = vmatpush1.bf16.msra.mxu0 0
    %795 = vmatprep.subr.bf16.mxu0 0
    %796 = vmatpush1.bf16.msra.mxu0 0
    %797 = vmatprep.subr.bf16.mxu0 0
    %798 = vmatpush1.bf16.msra.mxu0 0
    %799 = vmatprep.subr.bf16.mxu0 0
    %800 = vmatpush1.bf16.msra.mxu0 0
    %801 = vmatprep.subr.bf16.mxu0 0
    %802 = vmatpush1.bf16.msra.mxu0 0
    %803 = vmatprep.subr.bf16.mxu0 0
    %804 = vmatpush1.bf16.msra.mxu0 0
    %805 = vmatprep.subr.bf16.mxu0 0
    %806 = vmatpush1.bf16.msra.mxu0 0
    %807 = vmatprep.subr.bf16.mxu0 0
    %808 = vmatpush1.bf16.msra.mxu0 0
    %809 = vmatprep.mubr.bf16.mxu0 0
    %810 = vmatmul.mubr.bf16.gmra.mrb[0].mxu0 %v680
    %v811 = vpop.f32.mrb[0].mxu0
    %v812 = vadd.f32 0.0, %v811
    %v813 = vpop.f32.mrb[0].mxu0
    %v814 = vpop.f32.mrb[0].mxu0
    %v815 = vpop.f32.mrb[0].mxu0
    %816 = vdwg.mxu0
    %v817 = vadd.f32 %v776, %v812
    %v818 = vmul.f32 %v817, %v79
    %v819 = vtanh.pop %v818
    %v820 = vmul.f32 %v819, %v79
    %v821 = vadd.f32 %v820, %v80
    %822 = vrot.lane.b32.xlu0 %v821, 64
    %v823 = vpop.permute.xlu0 %822
    %v824 = vmul.f32 %v821, %v823
    %825 = vrot.lane.b32.xlu0 %v824, 32
    %v826 = vpop.permute.xlu0 %825
    %v827 = vmul.f32 %v821, %v677
    %v828 = vadd.f32 %v827, %v826
    %v829 = vtanh.pop %v828
    %v830 = vmul.f32 %v823, %v829
    %v831 = vpack.c.bf16 %v830, %v830
    %832 = vmatprep.subr.bf16.mxu0 0
    %833 = vmatpush1.bf16.msra.mxu0 %v310
    %834 = vmatprep.subr.bf16.mxu0 0
    %835 = vmatpush1.bf16.msra.mxu0 %v311
    %836 = vmatprep.subr.bf16.mxu0 0
    %837 = vmatpush1.bf16.msra.mxu0 %v312
    %838 = vmatprep.subr.bf16.mxu0 0
    %839 = vmatpush1.bf16.msra.mxu0 %v313
    %840 = vmatprep.subr.bf16.mxu0 0
    %841 = vmatpush1.bf16.msra.mxu0 %v314
    %842 = vmatprep.subr.bf16.mxu0 0
    %843 = vmatpush1.bf16.msra.mxu0 %v315
    %844 = vmatprep.subr.bf16.mxu0 0
    %845 = vmatpush1.bf16.msra.mxu0 %v316
    %846 = vmatprep.subr.bf16.mxu0 0
    %847 = vmatpush1.bf16.msra.mxu0 %v317
    %848 = vmatprep.subr.bf16.mxu0 0
    %849 = vmatpush1.bf16.msra.mxu0 0
    %850 = vmatprep.subr.bf16.mxu0 0
    %851 = vmatpush1.bf16.msra.mxu0 0
    %852 = vmatprep.subr.bf16.mxu0 0
    %853 = vmatpush1.bf16.msra.mxu0 0
    %854 = vmatprep.subr.bf16.mxu0 0
    %855 = vmatpush1.bf16.msra.mxu0 0
    %856 = vmatprep.subr.bf16.mxu0 0
    %857 = vmatpush1.bf16.msra.mxu0 0
    %858 = vmatprep.subr.bf16.mxu0 0
    %859 = vmatpush1.bf16.msra.mxu0 0
    %860 = vmatprep.subr.bf16.mxu0 0
    %861 = vmatpush1.bf16.msra.mxu0 0
    %862 = vmatprep.subr.bf16.mxu0 0
    %863 = vmatpush1.bf16.msra.mxu0 0
    %864 = vmatprep.mubr.bf16.mxu0 0
    %865 = vmatmul.mubr.bf16.gmra.mrb[0].mxu0 %v831
    %v866 = vpop.f32.mrb[0].mxu0
    %v867 = vadd.f32 %v263, %v866
    %v868 = vpop.f32.mrb[0].mxu0
    %v869 = vpop.f32.mrb[0].mxu0
    %v870 = vpop.f32.mrb[0].mxu0
    %871 = vdwg.mxu0
    %872 = vmatprep.subr.bf16.mxu0 0
    %873 = vmatpush1.bf16.msra.mxu0 %v554
    %874 = vmatprep.subr.bf16.mxu0 0
    %875 = vmatpush1.bf16.msra.mxu0 %v555
    %876 = vmatprep.subr.bf16.mxu0 0
    %877 = vmatpush1.bf16.msra.mxu0 %v556
    %878 = vmatprep.subr.bf16.mxu0 0
    %879 = vmatpush1.bf16.msra.mxu0 %v557
    %880 = vmatprep.subr.bf16.mxu0 0
    %881 = vmatpush1.bf16.msra.mxu0 %v558
    %882 = vmatprep.subr.bf16.mxu0 0
    %883 = vmatpush1.bf16.msra.mxu0 %v559
    %884 = vmatprep.subr.bf16.mxu0 0
    %885 = vmatpush1.bf16.msra.mxu0 %v560
    %886 = vmatprep.subr.bf16.mxu0 0
    %887 = vmatpush1.bf16.msra.mxu0 %v561
    %888 = vmatprep.subr.bf16.mxu0 0
    %889 = vmatpush1.bf16.msra.mxu0 0
    %890 = vmatprep.subr.bf16.mxu0 0
    %891 = vmatpush1.bf16.msra.mxu0 0
    %892 = vmatprep.subr.bf16.mxu0 0
    %893 = vmatpush1.bf16.msra.mxu0 0
    %894 = vmatprep.subr.bf16.mxu0 0
    %895 = vmatpush1.bf16.msra.mxu0 0
    %896 = vmatprep.subr.bf16.mxu0 0
    %897 = vmatpush1.bf16.msra.mxu0 0
    %898 = vmatprep.subr.bf16.mxu0 0
    %899 = vmatpush1.bf16.msra.mxu0 0
    %900 = vmatprep.subr.bf16.mxu0 0
    %901 = vmatpush1.bf16.msra.mxu0 0
    %902 = vmatprep.subr.bf16.mxu0 0
    %903 = vmatpush1.bf16.msra.mxu0 0
    %904 = vmatprep.mubr.bf16.mxu0 0
    %905 = vmatmul.mubr.bf16.gmra.mrb[0].mxu0 %v775
    %v906 = vpop.f32.mrb[0].mxu0
    %v907 = vadd.f32 0.0, %v906
    %v908 = vpop.f32.mrb[0].mxu0
    %v909 = vpop.f32.mrb[0].mxu0
    %v910 = vpop.f32.mrb[0].mxu0
    %911 = vdwg.mxu0
    %v912 = vadd.f32 %v867, %v907
    %v913 = vmul.f32 %v912, %v79
    %v914 = vtanh.pop %v913
    %v915 = vmul.f32 %v914, %v79
    %v916 = vadd.f32 %v915, %v80
    %917 = vrot.lane.b32.xlu0 %v916, 64
    %v918 = vpop.permute.xlu0 %917
    %v919 = vmul.f32 %v916, %v918
    %920 = vrot.lane.b32.xlu0 %v919, 32
    %v921 = vpop.permute.xlu0 %920
    %v922 = vmul.f32 %v916, %v772
    %v923 = vadd.f32 %v922, %v921
    %v924 = vtanh.pop %v923
    %v925 = vmul.f32 %v918, %v924
    %v926 = vpack.c.bf16 %v925, %v925
    %v927 = vld [vmem:[#allocation2 + $0x20] sm:$0xff]
    %928 = vmatprep.subr.bf16.mxu0 0
    %929 = vmatpush1.bf16.msra.mxu0 %v411
    %930 = vmatprep.subr.bf16.mxu0 0
    %931 = vmatpush1.bf16.msra.mxu0 %v412
    %932 = vmatprep.subr.bf16.mxu0 0
    %933 = vmatpush1.bf16.msra.mxu0 %v413
    %934 = vmatprep.subr.bf16.mxu0 0
    %935 = vmatpush1.bf16.msra.mxu0 %v414
    %936 = vmatprep.subr.bf16.mxu0 0
    %937 = vmatpush1.bf16.msra.mxu0 %v415
    %938 = vmatprep.subr.bf16.mxu0 0
    %939 = vmatpush1.bf16.msra.mxu0 %v416
    %940 = vmatprep.subr.bf16.mxu0 0
    %941 = vmatpush1.bf16.msra.mxu0 %v417
    %942 = vmatprep.subr.bf16.mxu0 0
    %943 = vmatpush1.bf16.msra.mxu0 %v418
    %944 = vmatprep.subr.bf16.mxu0 0
    %945 = vmatpush1.bf16.msra.mxu0 0
    %946 = vmatprep.subr.bf16.mxu0 0
    %947 = vmatpush1.bf16.msra.mxu0 0
    %948 = vmatprep.subr.bf16.mxu0 0
    %949 = vmatpush1.bf16.msra.mxu0 0
    %950 = vmatprep.subr.bf16.mxu0 0
    %951 = vmatpush1.bf16.msra.mxu0 0
    %952 = vmatprep.subr.bf16.mxu0 0
    %953 = vmatpush1.bf16.msra.mxu0 0
    %954 = vmatprep.subr.bf16.mxu0 0
    %955 = vmatpush1.bf16.msra.mxu0 0
    %956 = vmatprep.subr.bf16.mxu0 0
    %957 = vmatpush1.bf16.msra.mxu0 0
    %958 = vmatprep.subr.bf16.mxu0 0
    %959 = vmatpush1.bf16.msra.mxu0 0
    %960 = vmatprep.mubr.bf16.mxu0 0
    %961 = vmatmul.mubr.bf16.gmra.mrb[0].mxu0 %v831
    %v962 = vpop.f32.mrb[0].mxu0
    %v963 = vadd.f32 0.0, %v962
    %v964 = vpop.f32.mrb[0].mxu0
    %v965 = vpop.f32.mrb[0].mxu0
    %v966 = vpop.f32.mrb[0].mxu0
    %967 = vdwg.mxu0
    %v968 = vadd.f32 %v927, %v963
    %v969 = vmul.f32 %v968, %v79
    %v970 = vtanh.pop %v969
    %v971 = vmul.f32 %v970, %v79
    %v972 = vadd.f32 %v971, %v80
    %973 = vrot.lane.b32.xlu0 %v972, 64
    %v974 = vpop.permute.xlu0 %973
    %v975 = vmul.f32 %v972, %v974
    %976 = vrot.lane.b32.xlu0 %v975, 32
    %v977 = vpop.permute.xlu0 %976
    %v978 = vmul.f32 %v972, %v828
    %v979 = vadd.f32 %v978, %v977
    %v980 = vtanh.pop %v979
    %v981 = vmul.f32 %v974, %v980
    %v982 = vpack.c.bf16 %v981, %v981
    %983 = vmatprep.subr.bf16.mxu0 0
    %984 = vmatpush1.bf16.msra.mxu0 %v310
    %985 = vmatprep.subr.bf16.mxu0 0
    %986 = vmatpush1.bf16.msra.mxu0 %v311
    %987 = vmatprep.subr.bf16.mxu0 0
    %988 = vmatpush1.bf16.msra.mxu0 %v312
    %989 = vmatprep.subr.bf16.mxu0 0
    %990 = vmatpush1.bf16.msra.mxu0 %v313
    %991 = vmatprep.subr.bf16.mxu0 0
    %992 = vmatpush1.bf16.msra.mxu0 %v314
    %993 = vmatprep.subr.bf16.mxu0 0
    %994 = vmatpush1.bf16.msra.mxu0 %v315
    %995 = vmatprep.subr.bf16.mxu0 0
    %996 = vmatpush1.bf16.msra.mxu0 %v316
    %997 = vmatprep.subr.bf16.mxu0 0
    %998 = vmatpush1.bf16.msra.mxu0 %v317
    %999 = vmatprep.subr.bf16.mxu0 0
    %1000 = vmatpush1.bf16.msra.mxu0 0
    %1001 = vmatprep.subr.bf16.mxu0 0
    %1002 = vmatpush1.bf16.msra.mxu0 0
    %1003 = vmatprep.subr.bf16.mxu0 0
    %1004 = vmatpush1.bf16.msra.mxu0 0
    %1005 = vmatprep.subr.bf16.mxu0 0
    %1006 = vmatpush1.bf16.msra.mxu0 0
    %1007 = vmatprep.subr.bf16.mxu0 0
    %1008 = vmatpush1.bf16.msra.mxu0 0
    %1009 = vmatprep.subr.bf16.mxu0 0
    %1010 = vmatpush1.bf16.msra.mxu0 0
    %1011 = vmatprep.subr.bf16.mxu0 0
    %1012 = vmatpush1.bf16.msra.mxu0 0
    %1013 = vmatprep.subr.bf16.mxu0 0
    %1014 = vmatpush1.bf16.msra.mxu0 0
    %1015 = vmatprep.mubr.bf16.mxu0 0
    %1016 = vmatmul.mubr.bf16.gmra.mrb[0].mxu0 %v982
    %v1017 = vpop.f32.mrb[0].mxu0
    %v1018 = vadd.f32 %v263, %v1017
    %v1019 = vpop.f32.mrb[0].mxu0
    %v1020 = vpop.f32.mrb[0].mxu0
    %v1021 = vpop.f32.mrb[0].mxu0
    %1022 = vdwg.mxu0
    %1023 = vmatprep.subr.bf16.mxu0 0
    %1024 = vmatpush1.bf16.msra.mxu0 %v554
    %1025 = vmatprep.subr.bf16.mxu0 0
    %1026 = vmatpush1.bf16.msra.mxu0 %v555
    %1027 = vmatprep.subr.bf16.mxu0 0
    %1028 = vmatpush1.bf16.msra.mxu0 %v556
    %1029 = vmatprep.subr.bf16.mxu0 0
    %1030 = vmatpush1.bf16.msra.mxu0 %v557
    %1031 = vmatprep.subr.bf16.mxu0 0
    %1032 = vmatpush1.bf16.msra.mxu0 %v558
    %1033 = vmatprep.subr.bf16.mxu0 0
    %1034 = vmatpush1.bf16.msra.mxu0 %v559
    %1035 = vmatprep.subr.bf16.mxu0 0
    %1036 = vmatpush1.bf16.msra.mxu0 %v560
    %1037 = vmatprep.subr.bf16.mxu0 0
    %1038 = vmatpush1.bf16.msra.mxu0 %v561
    %1039 = vmatprep.subr.bf16.mxu0 0
    %1040 = vmatpush1.bf16.msra.mxu0 0
    %1041 = vmatprep.subr.bf16.mxu0 0
    %1042 = vmatpush1.bf16.msra.mxu0 0
    %1043 = vmatprep.subr.bf16.mxu0 0
    %1044 = vmatpush1.bf16.msra.mxu0 0
    %1045 = vmatprep.subr.bf16.mxu0 0
    %1046 = vmatpush1.bf16.msra.mxu0 0
    %1047 = vmatprep.subr.bf16.mxu0 0
    %1048 = vmatpush1.bf16.msra.mxu0 0
    %1049 = vmatprep.subr.bf16.mxu0 0
    %1050 = vmatpush1.bf16.msra.mxu0 0
    %1051 = vmatprep.subr.bf16.mxu0 0
    %1052 = vmatpush1.bf16.msra.mxu0 0
    %1053 = vmatprep.subr.bf16.mxu0 0
    %1054 = vmatpush1.bf16.msra.mxu0 0
    %1055 = vmatprep.mubr.bf16.mxu0 0
    %1056 = vmatmul.mubr.bf16.gmra.mrb[0].mxu0 %v926
    %v1057 = vpop.f32.mrb[0].mxu0
    %v1058 = vadd.f32 0.0, %v1057
    %v1059 = vpop.f32.mrb[0].mxu0
    %v1060 = vpop.f32.mrb[0].mxu0
    %v1061 = vpop.f32.mrb[0].mxu0
    %1062 = vdwg.mxu0
    %v1063 = vadd.f32 %v1018, %v1058
    %v1064 = vmul.f32 %v1063, %v79
    %v1065 = vtanh.pop %v1064
    %v1066 = vmul.f32 %v1065, %v79
    %v1067 = vadd.f32 %v1066, %v80
    %1068 = vrot.lane.b32.xlu0 %v1067, 64
    %v1069 = vpop.permute.xlu0 %1068
    %v1070 = vmul.f32 %v1067, %v1069
    %1071 = vrot.lane.b32.xlu0 %v1070, 32
    %v1072 = vpop.permute.xlu0 %1071
    %v1073 = vmul.f32 %v1067, %v923
    %v1074 = vadd.f32 %v1073, %v1072
    %v1075 = vtanh.pop %v1074
    %v1076 = vmul.f32 %v1069, %v1075
    %v1077 = vpack.c.bf16 %v1076, %v1076
    %v1078 = vld [vmem:[#allocation2 + $0x28] sm:$0xff]
    %1079 = vmatprep.subr.bf16.mxu0 0
    %1080 = vmatpush1.bf16.msra.mxu0 %v411
    %1081 = vmatprep.subr.bf16.mxu0 0
    %1082 = vmatpush1.bf16.msra.mxu0 %v412
    %1083 = vmatprep.subr.bf16.mxu0 0
    %1084 = vmatpush1.bf16.msra.mxu0 %v413
    %1085 = vmatprep.subr.bf16.mxu0 0
    %1086 = vmatpush1.bf16.msra.mxu0 %v414
    %1087 = vmatprep.subr.bf16.mxu0 0
    %1088 = vmatpush1.bf16.msra.mxu0 %v415
    %1089 = vmatprep.subr.bf16.mxu0 0
    %1090 = vmatpush1.bf16.msra.mxu0 %v416
    %1091 = vmatprep.subr.bf16.mxu0 0
    %1092 = vmatpush1.bf16.msra.mxu0 %v417
    %1093 = vmatprep.subr.bf16.mxu0 0
    %1094 = vmatpush1.bf16.msra.mxu0 %v418
    %1095 = vmatprep.subr.bf16.mxu0 0
    %1096 = vmatpush1.bf16.msra.mxu0 0
    %1097 = vmatprep.subr.bf16.mxu0 0
    %1098 = vmatpush1.bf16.msra.mxu0 0
    %1099 = vmatprep.subr.bf16.mxu0 0
    %1100 = vmatpush1.bf16.msra.mxu0 0
    %1101 = vmatprep.subr.bf16.mxu0 0
    %1102 = vmatpush1.bf16.msra.mxu0 0
    %1103 = vmatprep.subr.bf16.mxu0 0
    %1104 = vmatpush1.bf16.msra.mxu0 0
    %1105 = vmatprep.subr.bf16.mxu0 0
    %1106 = vmatpush1.bf16.msra.mxu0 0
    %1107 = vmatprep.subr.bf16.mxu0 0
    %1108 = vmatpush1.bf16.msra.mxu0 0
    %1109 = vmatprep.subr.bf16.mxu0 0
    %1110 = vmatpush1.bf16.msra.mxu0 0
    %1111 = vmatprep.mubr.bf16.mxu0 0
    %1112 = vmatmul.mubr.bf16.gmra.mrb[0].mxu0 %v982
    %v1113 = vpop.f32.mrb[0].mxu0
    %v1114 = vadd.f32 0.0, %v1113
    %v1115 = vpop.f32.mrb[0].mxu0
    %v1116 = vpop.f32.mrb[0].mxu0
    %v1117 = vpop.f32.mrb[0].mxu0
    %1118 = vdwg.mxu0
    %v1119 = vadd.f32 %v1078, %v1114
    %v1120 = vmul.f32 %v1119, %v79
    %v1121 = vtanh.pop %v1120
    %v1122 = vmul.f32 %v1121, %v79
    %v1123 = vadd.f32 %v1122, %v80
    %1124 = vrot.lane.b32.xlu0 %v1123, 64
    %v1125 = vpop.permute.xlu0 %1124
    %v1126 = vmul.f32 %v1123, %v1125
    %1127 = vrot.lane.b32.xlu0 %v1126, 32
    %v1128 = vpop.permute.xlu0 %1127
    %v1129 = vmul.f32 %v1123, %v979
    %v1130 = vadd.f32 %v1129, %v1128
    %v1131 = vtanh.pop %v1130
    %v1132 = vmul.f32 %v1125, %v1131
    %v1133 = vpack.c.bf16 %v1132, %v1132
    %1134 = vmatprep.subr.bf16.mxu0 0
    %1135 = vmatpush1.bf16.msra.mxu0 %v310
    %1136 = vmatprep.subr.bf16.mxu0 0
    %1137 = vmatpush1.bf16.msra.mxu0 %v311
    %1138 = vmatprep.subr.bf16.mxu0 0
    %1139 = vmatpush1.bf16.msra.mxu0 %v312
    %1140 = vmatprep.subr.bf16.mxu0 0
    %1141 = vmatpush1.bf16.msra.mxu0 %v313
    %1142 = vmatprep.subr.bf16.mxu0 0
    %1143 = vmatpush1.bf16.msra.mxu0 %v314
    %1144 = vmatprep.subr.bf16.mxu0 0
    %1145 = vmatpush1.bf16.msra.mxu0 %v315
    %1146 = vmatprep.subr.bf16.mxu0 0
    %1147 = vmatpush1.bf16.msra.mxu0 %v316
    %1148 = vmatprep.subr.bf16.mxu0 0
    %1149 = vmatpush1.bf16.msra.mxu0 %v317
    %1150 = vmatprep.subr.bf16.mxu0 0
    %1151 = vmatpush1.bf16.msra.mxu0 0
    %1152 = vmatprep.subr.bf16.mxu0 0
    %1153 = vmatpush1.bf16.msra.mxu0 0
    %1154 = vmatprep.subr.bf16.mxu0 0
    %1155 = vmatpush1.bf16.msra.mxu0 0
    %1156 = vmatprep.subr.bf16.mxu0 0
    %1157 = vmatpush1.bf16.msra.mxu0 0
    %1158 = vmatprep.subr.bf16.mxu0 0
    %1159 = vmatpush1.bf16.msra.mxu0 0
    %1160 = vmatprep.subr.bf16.mxu0 0
    %1161 = vmatpush1.bf16.msra.mxu0 0
    %1162 = vmatprep.subr.bf16.mxu0 0
    %1163 = vmatpush1.bf16.msra.mxu0 0
    %1164 = vmatprep.subr.bf16.mxu0 0
    %1165 = vmatpush1.bf16.msra.mxu0 0
    %1166 = vmatprep.mubr.bf16.mxu0 0
    %1167 = vmatmul.mubr.bf16.gmra.mrb[0].mxu0 %v1133
    %v1168 = vpop.f32.mrb[0].mxu0
    %v1169 = vadd.f32 %v263, %v1168
    %v1170 = vpop.f32.mrb[0].mxu0
    %v1171 = vpop.f32.mrb[0].mxu0
    %v1172 = vpop.f32.mrb[0].mxu0
    %1173 = vdwg.mxu0
    %1174 = vmatprep.subr.bf16.mxu0 0
    %1175 = vmatpush1.bf16.msra.mxu0 %v554
    %1176 = vmatprep.subr.bf16.mxu0 0
    %1177 = vmatpush1.bf16.msra.mxu0 %v555
    %1178 = vmatprep.subr.bf16.mxu0 0
    %1179 = vmatpush1.bf16.msra.mxu0 %v556
    %1180 = vmatprep.subr.bf16.mxu0 0
    %1181 = vmatpush1.bf16.msra.mxu0 %v557
    %1182 = vmatprep.subr.bf16.mxu0 0
    %1183 = vmatpush1.bf16.msra.mxu0 %v558
    %1184 = vmatprep.subr.bf16.mxu0 0
    %1185 = vmatpush1.bf16.msra.mxu0 %v559
    %1186 = vmatprep.subr.bf16.mxu0 0
    %1187 = vmatpush1.bf16.msra.mxu0 %v560
    %1188 = vmatprep.subr.bf16.mxu0 0
    %1189 = vmatpush1.bf16.msra.mxu0 %v561
    %1190 = vmatprep.subr.bf16.mxu0 0
    %1191 = vmatpush1.bf16.msra.mxu0 0
    %1192 = vmatprep.subr.bf16.mxu0 0
    %1193 = vmatpush1.bf16.msra.mxu0 0
    %1194 = vmatprep.subr.bf16.mxu0 0
    %1195 = vmatpush1.bf16.msra.mxu0 0
    %1196 = vmatprep.subr.bf16.mxu0 0
    %1197 = vmatpush1.bf16.msra.mxu0 0
    %1198 = vmatprep.subr.bf16.mxu0 0
    %1199 = vmatpush1.bf16.msra.mxu0 0
    %1200 = vmatprep.subr.bf16.mxu0 0
    %1201 = vmatpush1.bf16.msra.mxu0 0
    %1202 = vmatprep.subr.bf16.mxu0 0
    %1203 = vmatpush1.bf16.msra.mxu0 0
    %1204 = vmatprep.subr.bf16.mxu0 0
    %1205 = vmatpush1.bf16.msra.mxu0 0
    %1206 = vmatprep.mubr.bf16.mxu0 0
    %1207 = vmatmul.mubr.bf16.gmra.mrb[0].mxu0 %v1077
    %v1208 = vpop.f32.mrb[0].mxu0
    %v1209 = vadd.f32 0.0, %v1208
    %v1210 = vpop.f32.mrb[0].mxu0
    %v1211 = vpop.f32.mrb[0].mxu0
    %v1212 = vpop.f32.mrb[0].mxu0
    %1213 = vdwg.mxu0
    %v1214 = vadd.f32 %v1169, %v1209
    %v1215 = vmul.f32 %v1214, %v79
    %v1216 = vtanh.pop %v1215
    %v1217 = vmul.f32 %v1216, %v79
    %v1218 = vadd.f32 %v1217, %v80
    %1219 = vrot.lane.b32.xlu0 %v1218, 64
    %v1220 = vpop.permute.xlu0 %1219
    %v1221 = vmul.f32 %v1218, %v1220
    %1222 = vrot.lane.b32.xlu0 %v1221, 32
    %v1223 = vpop.permute.xlu0 %1222
    %v1224 = vmul.f32 %v1218, %v1074
    %v1225 = vadd.f32 %v1224, %v1223
    %v1226 = vtanh.pop %v1225
    %v1227 = vmul.f32 %v1220, %v1226
    %v1228 = vpack.c.bf16 %v1227, %v1227
    %v1229 = vld [vmem:[#allocation2 + $0x30] sm:$0xff]
    %1230 = vmatprep.subr.bf16.mxu0 0
    %1231 = vmatpush1.bf16.msra.mxu0 %v411
    %1232 = vmatprep.subr.bf16.mxu0 0
    %1233 = vmatpush1.bf16.msra.mxu0 %v412
    %1234 = vmatprep.subr.bf16.mxu0 0
    %1235 = vmatpush1.bf16.msra.mxu0 %v413
    %1236 = vmatprep.subr.bf16.mxu0 0
    %1237 = vmatpush1.bf16.msra.mxu0 %v414
    %1238 = vmatprep.subr.bf16.mxu0 0
    %1239 = vmatpush1.bf16.msra.mxu0 %v415
    %1240 = vmatprep.subr.bf16.mxu0 0
    %1241 = vmatpush1.bf16.msra.mxu0 %v416
    %1242 = vmatprep.subr.bf16.mxu0 0
    %1243 = vmatpush1.bf16.msra.mxu0 %v417
    %1244 = vmatprep.subr.bf16.mxu0 0
    %1245 = vmatpush1.bf16.msra.mxu0 %v418
    %1246 = vmatprep.subr.bf16.mxu0 0
    %1247 = vmatpush1.bf16.msra.mxu0 0
    %1248 = vmatprep.subr.bf16.mxu0 0
    %1249 = vmatpush1.bf16.msra.mxu0 0
    %1250 = vmatprep.subr.bf16.mxu0 0
    %1251 = vmatpush1.bf16.msra.mxu0 0
    %1252 = vmatprep.subr.bf16.mxu0 0
    %1253 = vmatpush1.bf16.msra.mxu0 0
    %1254 = vmatprep.subr.bf16.mxu0 0
    %1255 = vmatpush1.bf16.msra.mxu0 0
    %1256 = vmatprep.subr.bf16.mxu0 0
    %1257 = vmatpush1.bf16.msra.mxu0 0
    %1258 = vmatprep.subr.bf16.mxu0 0
    %1259 = vmatpush1.bf16.msra.mxu0 0
    %1260 = vmatprep.subr.bf16.mxu0 0
    %1261 = vmatpush1.bf16.msra.mxu0 0
    %1262 = vmatprep.mubr.bf16.mxu0 0
    %1263 = vmatmul.mubr.bf16.gmra.mrb[0].mxu0 %v1133
    %v1264 = vpop.f32.mrb[0].mxu0
    %v1265 = vadd.f32 0.0, %v1264
    %v1266 = vpop.f32.mrb[0].mxu0
    %v1267 = vpop.f32.mrb[0].mxu0
    %v1268 = vpop.f32.mrb[0].mxu0
    %1269 = vdwg.mxu0
    %v1270 = vadd.f32 %v1229, %v1265
    %v1271 = vmul.f32 %v1270, %v79
    %v1272 = vtanh.pop %v1271
    %v1273 = vmul.f32 %v1272, %v79
    %v1274 = vadd.f32 %v1273, %v80
    %1275 = vrot.lane.b32.xlu0 %v1274, 64
    %v1276 = vpop.permute.xlu0 %1275
    %v1277 = vmul.f32 %v1274, %v1276
    %1278 = vrot.lane.b32.xlu0 %v1277, 32
    %v1279 = vpop.permute.xlu0 %1278
    %v1280 = vmul.f32 %v1274, %v1130
    %v1281 = vadd.f32 %v1280, %v1279
    %v1282 = vtanh.pop %v1281
    %v1283 = vmul.f32 %v1276, %v1282
    %v1284 = vpack.c.bf16 %v1283, %v1283
    %1285 = vmatprep.subr.bf16.mxu0 0
    %1286 = vmatpush1.bf16.msra.mxu0 %v310
    %1287 = vmatprep.subr.bf16.mxu0 0
    %1288 = vmatpush1.bf16.msra.mxu0 %v311
    %1289 = vmatprep.subr.bf16.mxu0 0
    %1290 = vmatpush1.bf16.msra.mxu0 %v312
    %1291 = vmatprep.subr.bf16.mxu0 0
    %1292 = vmatpush1.bf16.msra.mxu0 %v313
    %1293 = vmatprep.subr.bf16.mxu0 0
    %1294 = vmatpush1.bf16.msra.mxu0 %v314
    %1295 = vmatprep.subr.bf16.mxu0 0
    %1296 = vmatpush1.bf16.msra.mxu0 %v315
    %1297 = vmatprep.subr.bf16.mxu0 0
    %1298 = vmatpush1.bf16.msra.mxu0 %v316
    %1299 = vmatprep.subr.bf16.mxu0 0
    %1300 = vmatpush1.bf16.msra.mxu0 %v317
    %1301 = vmatprep.subr.bf16.mxu0 0
    %1302 = vmatpush1.bf16.msra.mxu0 0
    %1303 = vmatprep.subr.bf16.mxu0 0
    %1304 = vmatpush1.bf16.msra.mxu0 0
    %1305 = vmatprep.subr.bf16.mxu0 0
    %1306 = vmatpush1.bf16.msra.mxu0 0
    %1307 = vmatprep.subr.bf16.mxu0 0
    %1308 = vmatpush1.bf16.msra.mxu0 0
    %1309 = vmatprep.subr.bf16.mxu0 0
    %1310 = vmatpush1.bf16.msra.mxu0 0
    %1311 = vmatprep.subr.bf16.mxu0 0
    %1312 = vmatpush1.bf16.msra.mxu0 0
    %1313 = vmatprep.subr.bf16.mxu0 0
    %1314 = vmatpush1.bf16.msra.mxu0 0
    %1315 = vmatprep.subr.bf16.mxu0 0
    %1316 = vmatpush1.bf16.msra.mxu0 0
    %1317 = vmatprep.mubr.bf16.mxu0 0
    %1318 = vmatmul.mubr.bf16.gmra.mrb[0].mxu0 %v1284
    %v1319 = vpop.f32.mrb[0].mxu0
    %v1320 = vadd.f32 %v263, %v1319
    %v1321 = vpop.f32.mrb[0].mxu0
    %v1322 = vpop.f32.mrb[0].mxu0
    %v1323 = vpop.f32.mrb[0].mxu0
    %1324 = vdwg.mxu0
    %1325 = vmatprep.subr.bf16.mxu0 0
    %1326 = vmatpush1.bf16.msra.mxu0 %v554
    %1327 = vmatprep.subr.bf16.mxu0 0
    %1328 = vmatpush1.bf16.msra.mxu0 %v555
    %1329 = vmatprep.subr.bf16.mxu0 0
    %1330 = vmatpush1.bf16.msra.mxu0 %v556
    %1331 = vmatprep.subr.bf16.mxu0 0
    %1332 = vmatpush1.bf16.msra.mxu0 %v557
    %1333 = vmatprep.subr.bf16.mxu0 0
    %1334 = vmatpush1.bf16.msra.mxu0 %v558
    %1335 = vmatprep.subr.bf16.mxu0 0
    %1336 = vmatpush1.bf16.msra.mxu0 %v559
    %1337 = vmatprep.subr.bf16.mxu0 0
    %1338 = vmatpush1.bf16.msra.mxu0 %v560
    %1339 = vmatprep.subr.bf16.mxu0 0
    %1340 = vmatpush1.bf16.msra.mxu0 %v561
    %1341 = vmatprep.subr.bf16.mxu0 0
    %1342 = vmatpush1.bf16.msra.mxu0 0
    %1343 = vmatprep.subr.bf16.mxu0 0
    %1344 = vmatpush1.bf16.msra.mxu0 0
    %1345 = vmatprep.subr.bf16.mxu0 0
    %1346 = vmatpush1.bf16.msra.mxu0 0
    %1347 = vmatprep.subr.bf16.mxu0 0
    %1348 = vmatpush1.bf16.msra.mxu0 0
    %1349 = vmatprep.subr.bf16.mxu0 0
    %1350 = vmatpush1.bf16.msra.mxu0 0
    %1351 = vmatprep.subr.bf16.mxu0 0
    %1352 = vmatpush1.bf16.msra.mxu0 0
    %1353 = vmatprep.subr.bf16.mxu0 0
    %1354 = vmatpush1.bf16.msra.mxu0 0
    %1355 = vmatprep.subr.bf16.mxu0 0
    %1356 = vmatpush1.bf16.msra.mxu0 0
    %1357 = vmatprep.mubr.bf16.mxu0 0
    %1358 = vmatmul.mubr.bf16.gmra.mrb[0].mxu0 %v1228
    %v1359 = vpop.f32.mrb[0].mxu0
    %v1360 = vadd.f32 0.0, %v1359
    %v1361 = vpop.f32.mrb[0].mxu0
    %v1362 = vpop.f32.mrb[0].mxu0
    %v1363 = vpop.f32.mrb[0].mxu0
    %1364 = vdwg.mxu0
    %v1365 = vadd.f32 %v1320, %v1360
    %v1366 = vmul.f32 %v1365, %v79
    %v1367 = vtanh.pop %v1366
    %v1368 = vmul.f32 %v1367, %v79
    %v1369 = vadd.f32 %v1368, %v80
    %1370 = vrot.lane.b32.xlu0 %v1369, 64
    %v1371 = vpop.permute.xlu0 %1370
    %v1372 = vmul.f32 %v1369, %v1371
    %1373 = vrot.lane.b32.xlu0 %v1372, 32
    %v1374 = vpop.permute.xlu0 %1373
    %v1375 = vmul.f32 %v1369, %v1225
    %v1376 = vadd.f32 %v1375, %v1374
    %v1377 = vtanh.pop %v1376
    %v1378 = vmul.f32 %v1371, %v1377
    %v1379 = vpack.c.bf16 %v1378, %v1378
    %v1380 = vld [vmem:[#allocation2 + $0x38] sm:$0xff]
    %1381 = vmatprep.subr.bf16.mxu0 0
    %1382 = vmatpush1.bf16.msra.mxu0 %v411
    %1383 = vmatprep.subr.bf16.mxu0 0
    %1384 = vmatpush1.bf16.msra.mxu0 %v412
    %1385 = vmatprep.subr.bf16.mxu0 0
    %1386 = vmatpush1.bf16.msra.mxu0 %v413
    %1387 = vmatprep.subr.bf16.mxu0 0
    %1388 = vmatpush1.bf16.msra.mxu0 %v414
    %1389 = vmatprep.subr.bf16.mxu0 0
    %1390 = vmatpush1.bf16.msra.mxu0 %v415
    %1391 = vmatprep.subr.bf16.mxu0 0
    %1392 = vmatpush1.bf16.msra.mxu0 %v416
    %1393 = vmatprep.subr.bf16.mxu0 0
    %1394 = vmatpush1.bf16.msra.mxu0 %v417
    %1395 = vmatprep.subr.bf16.mxu0 0
    %1396 = vmatpush1.bf16.msra.mxu0 %v418
    %1397 = vmatprep.subr.bf16.mxu0 0
    %1398 = vmatpush1.bf16.msra.mxu0 0
    %1399 = vmatprep.subr.bf16.mxu0 0
    %1400 = vmatpush1.bf16.msra.mxu0 0
    %1401 = vmatprep.subr.bf16.mxu0 0
    %1402 = vmatpush1.bf16.msra.mxu0 0
    %1403 = vmatprep.subr.bf16.mxu0 0
    %1404 = vmatpush1.bf16.msra.mxu0 0
    %1405 = vmatprep.subr.bf16.mxu0 0
    %1406 = vmatpush1.bf16.msra.mxu0 0
    %1407 = vmatprep.subr.bf16.mxu0 0
    %1408 = vmatpush1.bf16.msra.mxu0 0
    %1409 = vmatprep.subr.bf16.mxu0 0
    %1410 = vmatpush1.bf16.msra.mxu0 0
    %1411 = vmatprep.subr.bf16.mxu0 0
    %1412 = vmatpush1.bf16.msra.mxu0 0
    %1413 = vmatprep.mubr.bf16.mxu0 0
    %1414 = vmatmul.mubr.bf16.gmra.mrb[0].mxu0 %v1284
    %v1415 = vpop.f32.mrb[0].mxu0
    %v1416 = vadd.f32 0.0, %v1415
    %v1417 = vpop.f32.mrb[0].mxu0
    %v1418 = vpop.f32.mrb[0].mxu0
    %v1419 = vpop.f32.mrb[0].mxu0
    %1420 = vdwg.mxu0
    %v1421 = vadd.f32 %v1380, %v1416
    %v1422 = vmul.f32 %v1421, %v79
    %v1423 = vtanh.pop %v1422
    %v1424 = vmul.f32 %v1423, %v79
    %v1425 = vadd.f32 %v1424, %v80
    %1426 = vrot.lane.b32.xlu0 %v1425, 64
    %v1427 = vpop.permute.xlu0 %1426
    %v1428 = vmul.f32 %v1425, %v1427
    %1429 = vrot.lane.b32.xlu0 %v1428, 32
    %v1430 = vpop.permute.xlu0 %1429
    %v1431 = vmul.f32 %v1425, %v1281
    %v1432 = vadd.f32 %v1431, %v1430
    %v1433 = vtanh.pop %v1432
    %v1434 = vmul.f32 %v1427, %v1433
    %v1435 = vpack.c.bf16 %v1434, %v1434
    %1436 = vmatprep.subr.bf16.mxu0 0
    %1437 = vmatpush1.bf16.msra.mxu0 %v310
    %1438 = vmatprep.subr.bf16.mxu0 0
    %1439 = vmatpush1.bf16.msra.mxu0 %v311
    %1440 = vmatprep.subr.bf16.mxu0 0
    %1441 = vmatpush1.bf16.msra.mxu0 %v312
    %1442 = vmatprep.subr.bf16.mxu0 0
    %1443 = vmatpush1.bf16.msra.mxu0 %v313
    %1444 = vmatprep.subr.bf16.mxu0 0
    %1445 = vmatpush1.bf16.msra.mxu0 %v314
    %1446 = vmatprep.subr.bf16.mxu0 0
    %1447 = vmatpush1.bf16.msra.mxu0 %v315
    %1448 = vmatprep.subr.bf16.mxu0 0
    %1449 = vmatpush1.bf16.msra.mxu0 %v316
    %1450 = vmatprep.subr.bf16.mxu0 0
    %1451 = vmatpush1.bf16.msra.mxu0 %v317
    %1452 = vmatprep.subr.bf16.mxu0 0
    %1453 = vmatpush1.bf16.msra.mxu0 0
    %1454 = vmatprep.subr.bf16.mxu0 0
    %1455 = vmatpush1.bf16.msra.mxu0 0
    %1456 = vmatprep.subr.bf16.mxu0 0
    %1457 = vmatpush1.bf16.msra.mxu0 0
    %1458 = vmatprep.subr.bf16.mxu0 0
    %1459 = vmatpush1.bf16.msra.mxu0 0
    %1460 = vmatprep.subr.bf16.mxu0 0
    %1461 = vmatpush1.bf16.msra.mxu0 0
    %1462 = vmatprep.subr.bf16.mxu0 0
    %1463 = vmatpush1.bf16.msra.mxu0 0
    %1464 = vmatprep.subr.bf16.mxu0 0
    %1465 = vmatpush1.bf16.msra.mxu0 0
    %1466 = vmatprep.subr.bf16.mxu0 0
    %1467 = vmatpush1.bf16.msra.mxu0 0
    %1468 = vmatprep.mubr.bf16.mxu0 0
    %1469 = vmatmul.mubr.bf16.gmra.mrb[0].mxu0 %v1435
    %v1470 = vpop.f32.mrb[0].mxu0
    %v1471 = vadd.f32 %v263, %v1470
    %v1472 = vpop.f32.mrb[0].mxu0
    %v1473 = vpop.f32.mrb[0].mxu0
    %v1474 = vpop.f32.mrb[0].mxu0
    %1475 = vdwg.mxu0
    %1476 = vmatprep.subr.bf16.mxu0 0
    %1477 = vmatpush1.bf16.msra.mxu0 %v554
    %1478 = vmatprep.subr.bf16.mxu0 0
    %1479 = vmatpush1.bf16.msra.mxu0 %v555
    %1480 = vmatprep.subr.bf16.mxu0 0
    %1481 = vmatpush1.bf16.msra.mxu0 %v556
    %1482 = vmatprep.subr.bf16.mxu0 0
    %1483 = vmatpush1.bf16.msra.mxu0 %v557
    %1484 = vmatprep.subr.bf16.mxu0 0
    %1485 = vmatpush1.bf16.msra.mxu0 %v558
    %1486 = vmatprep.subr.bf16.mxu0 0
    %1487 = vmatpush1.bf16.msra.mxu0 %v559
    %1488 = vmatprep.subr.bf16.mxu0 0
    %1489 = vmatpush1.bf16.msra.mxu0 %v560
    %1490 = vmatprep.subr.bf16.mxu0 0
    %1491 = vmatpush1.bf16.msra.mxu0 %v561
    %1492 = vmatprep.subr.bf16.mxu0 0
    %1493 = vmatpush1.bf16.msra.mxu0 0
    %1494 = vmatprep.subr.bf16.mxu0 0
    %1495 = vmatpush1.bf16.msra.mxu0 0
    %1496 = vmatprep.subr.bf16.mxu0 0
    %1497 = vmatpush1.bf16.msra.mxu0 0
    %1498 = vmatprep.subr.bf16.mxu0 0
    %1499 = vmatpush1.bf16.msra.mxu0 0
    %1500 = vmatprep.subr.bf16.mxu0 0
    %1501 = vmatpush1.bf16.msra.mxu0 0
    %1502 = vmatprep.subr.bf16.mxu0 0
    %1503 = vmatpush1.bf16.msra.mxu0 0
    %1504 = vmatprep.subr.bf16.mxu0 0
    %1505 = vmatpush1.bf16.msra.mxu0 0
    %1506 = vmatprep.subr.bf16.mxu0 0
    %1507 = vmatpush1.bf16.msra.mxu0 0
    %1508 = vmatprep.mubr.bf16.mxu0 0
    %1509 = vmatmul.mubr.bf16.gmra.mrb[0].mxu0 %v1379
    %v1510 = vpop.f32.mrb[0].mxu0
    %v1511 = vadd.f32 0.0, %v1510
    %v1512 = vpop.f32.mrb[0].mxu0
    %v1513 = vpop.f32.mrb[0].mxu0
    %v1514 = vpop.f32.mrb[0].mxu0
    %1515 = vdwg.mxu0
    %v1516 = vadd.f32 %v1471, %v1511
    %v1517 = vmul.f32 %v1516, %v79
    %v1518 = vtanh.pop %v1517
    %v1519 = vmul.f32 %v1518, %v79
    %v1520 = vadd.f32 %v1519, %v80
    %1521 = vrot.lane.b32.xlu0 %v1520, 64
    %v1522 = vpop.permute.xlu0 %1521
    %v1523 = vmul.f32 %v1520, %v1522
    %1524 = vrot.lane.b32.xlu0 %v1523, 32
    %v1525 = vpop.permute.xlu0 %1524
    %v1526 = vmul.f32 %v1520, %v1376
    %v1527 = vadd.f32 %v1526, %v1525
    %v1528 = vtanh.pop %v1527
    %v1529 = vmul.f32 %v1522, %v1528
    %v1530 = vld [vmem:[%s7] sm:$0xff]
    %v1531 = vld [vmem:[%s7 + $0x8] sm:$0xff]
    %v1532 = vld [vmem:[%s7 + $0x10] sm:$0xff]
    %v1533 = vld [vmem:[%s7 + $0x18] sm:$0xff]
    %v1534 = vld [vmem:[%s7 + $0x20] sm:$0xff]
    %v1535 = vld [vmem:[%s7 + $0x28] sm:$0xff]
    %v1536 = vld [vmem:[%s7 + $0x30] sm:$0xff]
    %v1537 = vld [vmem:[%s7 + $0x38] sm:$0xff]
    %v1538 = vld [vmem:[%s7 + $0x40] sm:$0xff]
    %v1539 = vld [vmem:[%s7 + $0x48] sm:$0xff]
    %v1540 = vld [vmem:[%s7 + $0x50] sm:$0xff]
    %v1541 = vld [vmem:[%s7 + $0x58] sm:$0xff]
    %v1542 = vld [vmem:[%s7 + $0x60] sm:$0xff]
    %v1543 = vld [vmem:[%s7 + $0x68] sm:$0xff]
    %v1544 = vld [vmem:[%s7 + $0x70] sm:$0xff]
    %v1545 = vld [vmem:[%s7 + $0x78] sm:$0xff]
    %v1546 = vld [vmem:[%s8] sm:$0x1]
    %v1548 = vlaneseq
    %v1549 = vshrl.u32 %v1548, 7
    %v1550 = vsub.s32 0, %v1549
    %v1551 = vrot.slane %v1546, %v1550
    %1553 = vmatprep.subr.mxu0 0.0
    %1554 = vmatpush1.msra.mxu0 %v1530
    %1555 = vmatprep.subr.mxu0 0.0
    %1556 = vmatpush1.msra.mxu0 %v1531
    %1557 = vmatprep.subr.mxu0 0.0
    %1558 = vmatpush1.msra.mxu0 %v1532
    %1559 = vmatprep.subr.mxu0 0.0
    %1560 = vmatpush1.msra.mxu0 %v1533
    %1561 = vmatprep.subr.mxu0 0.0
    %1562 = vmatpush1.msra.mxu0 %v1534
    %1563 = vmatprep.subr.mxu0 0.0
    %1564 = vmatpush1.msra.mxu0 %v1535
    %1565 = vmatprep.subr.mxu0 0.0
    %1566 = vmatpush1.msra.mxu0 %v1536
    %1567 = vmatprep.subr.mxu0 0.0
    %1568 = vmatpush1.msra.mxu0 %v1537
    %1569 = vmatprep.subr.mxu0 0.0
    %1570 = vmatpush1.msra.mxu0 %v1538
    %1571 = vmatprep.subr.mxu0 0.0
    %1572 = vmatpush1.msra.mxu0 %v1539
    %1573 = vmatprep.subr.mxu0 0.0
    %1574 = vmatpush1.msra.mxu0 %v1540
    %1575 = vmatprep.subr.mxu0 0.0
    %1576 = vmatpush1.msra.mxu0 %v1541
    %1577 = vmatprep.subr.mxu0 0.0
    %1578 = vmatpush1.msra.mxu0 %v1542
    %1579 = vmatprep.subr.mxu0 0.0
    %1580 = vmatpush1.msra.mxu0 %v1543
    %1581 = vmatprep.subr.mxu0 0.0
    %1582 = vmatpush1.msra.mxu0 %v1544
    %1583 = vmatprep.subr.mxu0 0.0
    %1584 = vmatpush1.msra.mxu0 %v1545
    %1585 = vmatprep.subr.mxu0 0.0
    %1586 = vmatpush1.msra.mxu0 0.0
    %1587 = vmatprep.subr.mxu0 0.0
    %1588 = vmatpush1.msra.mxu0 0.0
    %1589 = vmatprep.subr.mxu0 0.0
    %1590 = vmatpush1.msra.mxu0 0.0
    %1591 = vmatprep.subr.mxu0 0.0
    %1592 = vmatpush1.msra.mxu0 0.0
    %1593 = vmatprep.subr.mxu0 0.0
    %1594 = vmatpush1.msra.mxu0 0.0
    %1595 = vmatprep.subr.mxu0 0.0
    %1596 = vmatpush1.msra.mxu0 0.0
    %1597 = vmatprep.subr.mxu0 0.0
    %1598 = vmatpush1.msra.mxu0 0.0
    %1599 = vmatprep.subr.mxu0 0.0
    %1600 = vmatpush1.msra.mxu0 0.0
    %1601 = vmatprep.subr.mxu0 0.0
    %1602 = vmatpush1.msra.mxu0 0.0
    %1603 = vmatprep.subr.mxu0 0.0
    %1604 = vmatpush1.msra.mxu0 0.0
    %1605 = vmatprep.subr.mxu0 0.0
    %1606 = vmatpush1.msra.mxu0 0.0
    %1607 = vmatprep.subr.mxu0 0.0
    %1608 = vmatpush1.msra.mxu0 0.0
    %1609 = vmatprep.subr.mxu0 0.0
    %1610 = vmatpush1.msra.mxu0 0.0
    %1611 = vmatprep.subr.mxu0 0.0
    %1612 = vmatpush1.msra.mxu0 0.0
    %1613 = vmatprep.subr.mxu0 0.0
    %1614 = vmatpush1.msra.mxu0 0.0
    %1615 = vmatprep.subr.mxu0 0.0
    %1616 = vmatpush1.msra.mxu0 0.0
    %1617 = vmatprep.mubr.f32.mxu0 0.0
    %1618 = vmatmul.mubr.f32.gmra.mrb[0].mxu0 %v1529
    %v1619 = vpop.f32.mrb[0].mxu0
    %v1620 = vadd.f32 %v1551, %v1619
    %v1621 = vpop.f32.mrb[0].mxu0
    %1622 = vdwg.mxu0
    %1623 = vst [vmem:[%s9] sm:$0xff] %v1620
    // Predicated region
    $region50: #{lstm_har_forward.1} parent=1 // pred_check
      _
    $region51: #{lstm_har_forward.1} parent=1 // pred_check_branch
      %1625 = sbr.rel (0) target = $region53
    $region52: #{lstm_har_forward.1} parent=1 // pred_region
      _
    $region53: #{lstm_har_forward.1} parent=1 // pred_fallthru
      _
    // Predicated region
    $region54: #{lstm_har_forward.1} parent=1 // pred_check
      _
    $region55: #{lstm_har_forward.1} parent=1 // pred_check_branch
      %1627 = sbr.rel (0) target = $region57
    $region56: #{lstm_har_forward.1} parent=1 // pred_region
      _
    $region57: #{lstm_har_forward.1} parent=1 // pred_fallthru
      _
    %1628 = vsyncpa [#allocation4], 1
    %1629 = vsyncpa [#allocation6], 1

</llo_original>
